<compile_context>
chip_gen: v7x
topology: tpu7x:2x2x1
jax: 0.10.0
libtpu: 0.0.40
codegen_flags: <defaults>
</compile_context>

<pallas_src>
import math
import jax
import jax.numpy as jnp
from jax import lax
from jax.experimental import pallas as pl
from jax.experimental.pallas import tpu as pltpu

# ---- config (matches the module's __init__ shape requirements) ----
B = 2          # batch
S = 8          # sequence length
D_MODEL = 32   # cf.d_model
N_HEADS = 4
D_K = D_MODEL // N_HEADS
D_FF = 64
BS = B * S
LN_EPS = float(D_MODEL)   # module passes eps=cf.d_model — reproduced exactly
NEG_INF = -1e9

# ---- parameter-slab layout: one lane-dense (SLAB_ROWS, 128) f32 buffer ----
R_WQKV = 0            # (32, 96)  fused [Wq*scale | Wk | Wv]
R_WO = 32             # (32, 128) block-diagonal Wo (head h -> column block h)
R_W1 = 64             # (32, 64)
R_W2 = 96             # (64, 32)
R_GAMMA = 160         # (1, 32)
R_BETA = 161          # (1, 32)
R_BQKV = 162          # (1, 96)  fused [bq*scale | bk | bv]
R_BO = 163            # (1, 32)
R_B1 = 164            # (1, 64)
R_B2 = 165            # (1, 32)
SLAB_ROWS = 168       # padded to a multiple of 8 sublanes


def encoder_layer_kernel(x_ref, mask_ref, slab_ref, o_ref):
    x = x_ref[...]                 # (BS, D)
    slab = slab_ref[...]           # (SLAB_ROWS, 128)
    add_mask = mask_ref[...]       # (BS, BS) additive, block-diag (cross-batch = -1e9)

    # static slices of the parameter slab (compile-time views)
    gamma = slab[R_GAMMA:R_GAMMA + 1, 0:D_MODEL]
    beta = slab[R_BETA:R_BETA + 1, 0:D_MODEL]
    wqkv = slab[R_WQKV:R_WQKV + D_MODEL, 0:3 * D_MODEL]
    bqkv = slab[R_BQKV:R_BQKV + 1, 0:3 * D_MODEL]
    wo_bd = slab[R_WO:R_WO + D_MODEL, :]                 # (32, 128)
    bo = slab[R_BO:R_BO + 1, 0:D_MODEL]
    w1 = slab[R_W1:R_W1 + D_MODEL, 0:D_FF]
    b1 = slab[R_B1:R_B1 + 1, 0:D_FF]
    w2 = slab[R_W2:R_W2 + D_FF, 0:D_MODEL]
    b2 = slab[R_B2:R_B2 + 1, 0:D_MODEL]

    def layer_norm(v):             # module reuses one LayerNorm for both norms
        mu = jnp.mean(v, axis=-1, keepdims=True)
        var = jnp.mean((v - mu) ** 2, axis=-1, keepdims=True)
        return (v - mu) * lax.rsqrt(var + LN_EPS) * gamma + beta

    # ---- first norm + fused QKV projection (one MXU pass over the whole batch) ----
    xn = layer_norm(x)
    qkv = jnp.dot(xn, wqkv, preferred_element_type=jnp.float32) + bqkv   # (BS, 96)
    q = qkv[:, 0:D_MODEL]                     # score scale folded into Wq/bq
    k = qkv[:, D_MODEL:2 * D_MODEL]
    v = qkv[:, 2 * D_MODEL:3 * D_MODEL]

    # All 4 per-head v_h @ Wo_rows_h in ONE lane-dense matmul against block-diag Wo:
    # column block h of vwo == v[:, h*dk:(h+1)*dk] @ Wo[h*dk:(h+1)*dk, :]
    vwo = jnp.dot(v, wo_bd, preferred_element_type=jnp.float32)          # (BS, 128)

    # ---- attention: batch-merged per-head scores with block-diagonal mask ----
    attn = None
    for h in range(N_HEADS):                  # static unroll over heads
        sl = slice(h * D_K, (h + 1) * D_K)
        scores = lax.dot_general(             # q @ k.T, no materialized transpose
            q[:, sl], k[:, sl],
            dimension_numbers=(((1,), (1,)), ((), ())),
            preferred_element_type=jnp.float32,
        ) + add_mask                          # (BS, BS)
        m = jnp.max(scores, axis=-1, keepdims=True)
        e = jnp.exp(scores - m)
        p = e * pl.reciprocal(jnp.sum(e, axis=-1, keepdims=True), approx=True)
        contrib = jnp.dot(p, vwo[:, h * D_MODEL:(h + 1) * D_MODEL],
                          preferred_element_type=jnp.float32)
        attn = contrib if attn is None else attn + contrib

    out1 = x + attn + bo

    # ---- second norm + position-wise feed-forward (whole batch in one pass) ----
    n2 = layer_norm(out1)
    h1 = jnp.maximum(jnp.dot(n2, w1, preferred_element_type=jnp.float32) + b1, 0.0)
    ffn = jnp.dot(h1, w2, preferred_element_type=jnp.float32) + b2

    o_ref[...] = out1 + ffn                   # single full-tile store


def prepare_params(p):
    """One-time parameter packing (out of the hot path): fuse QKV, fold the
    1/sqrt(d_k) score scale into the Q projection, block-diagonalize Wo, and
    pack everything into one lane-dense (SLAB_ROWS, 128) slab."""
    scale = 1.0 / math.sqrt(D_K)
    wqkv = jnp.concatenate([p["wq"] * scale, p["wk"], p["wv"]], axis=1)   # (32, 96)
    bqkv = jnp.concatenate([p["bq"] * scale, p["bk"], p["bv"]], axis=1)   # (1, 96)

    wo_bd = jnp.zeros((D_MODEL, N_HEADS * D_MODEL), jnp.float32)          # (32, 128)
    for h in range(N_HEADS):
        wo_bd = wo_bd.at[h * D_K:(h + 1) * D_K,
                         h * D_MODEL:(h + 1) * D_MODEL].set(
            p["wo"][h * D_K:(h + 1) * D_K, :])

    slab = jnp.zeros((SLAB_ROWS, 128), jnp.float32)
    slab = slab.at[R_WQKV:R_WQKV + D_MODEL, 0:3 * D_MODEL].set(wqkv)
    slab = slab.at[R_WO:R_WO + D_MODEL, :].set(wo_bd)
    slab = slab.at[R_W1:R_W1 + D_MODEL, 0:D_FF].set(p["w1"])
    slab = slab.at[R_W2:R_W2 + D_FF, 0:D_MODEL].set(p["w2"])
    slab = slab.at[R_GAMMA:R_GAMMA + 1, 0:D_MODEL].set(p["gamma"])
    slab = slab.at[R_BETA:R_BETA + 1, 0:D_MODEL].set(p["beta"])
    slab = slab.at[R_BQKV:R_BQKV + 1, 0:3 * D_MODEL].set(bqkv)
    slab = slab.at[R_BO:R_BO + 1, 0:D_MODEL].set(p["bo"])
    slab = slab.at[R_B1:R_B1 + 1, 0:D_FF].set(p["b1"])
    slab = slab.at[R_B2:R_B2 + 1, 0:D_MODEL].set(p["b2"])
    return slab


@jax.jit
def encoder_layer(x, mask, slab):
    """x: (B,S,D) f32, mask: (B,S,S) f32 (1 keep / 0 masked), slab: prepare_params()."""
    # block-diagonal additive mask over the flattened batch: 0 keep, -1e9 masked /
    # cross-batch.  Built here (tiny XLA work), shipped in the shape the kernel needs.
    keep = jnp.einsum("bij,bc->bicj", mask,
                      jnp.eye(B, dtype=mask.dtype)).reshape(BS, BS)
    add_mask = (keep - 1.0) * 1e9

    vmem = lambda: pl.BlockSpec(memory_space=pltpu.MemorySpace.VMEM)
    out2 = pl.pallas_call(
        encoder_layer_kernel,
        out_shape=jax.ShapeDtypeStruct((BS, D_MODEL), jnp.float32),
        in_specs=[vmem(), vmem(), vmem()],
        out_specs=vmem(),
    )(x.reshape(BS, D_MODEL), add_mask, slab)
    return out2.reshape(B, S, D_MODEL)


def reference(x, mask, p):
    """Pure-JAX reference for correctness check (mirrors the PyTorch forward)."""
    def ln(v):
        mu = jnp.mean(v, axis=-1, keepdims=True)
        var = jnp.mean((v - mu) ** 2, axis=-1, keepdims=True)
        return (v - mu) / jnp.sqrt(var + LN_EPS) * p["gamma"] + p["beta"]

    xn = ln(x)
    q = xn @ p["wq"] + p["bq"]
    k = xn @ p["wk"] + p["bk"]
    v = xn @ p["wv"] + p["bv"]
    q = q.reshape(B, S, N_HEADS, D_K).transpose(0, 2, 1, 3)
    k = k.reshape(B, S, N_HEADS, D_K).transpose(0, 2, 1, 3)
    v = v.reshape(B, S, N_HEADS, D_K).transpose(0, 2, 1, 3)
    scores = jnp.einsum("bhqd,bhkd->bhqk", q, k) / math.sqrt(D_K)
    scores = jnp.where(mask[:, None, :, :] == 0.0, NEG_INF, scores)
    pattn = jax.nn.softmax(scores, axis=-1)
    ctx = jnp.einsum("bhqk,bhkd->bhqd", pattn, v).transpose(0, 2, 1, 3).reshape(B, S, D_MODEL)
    attn = ctx @ p["wo"] + p["bo"]
    out1 = x + attn
    n2 = ln(out1)
    ffn = jnp.maximum(n2 @ p["w1"] + p["b1"], 0.0) @ p["w2"] + p["b2"]
    return out1 + ffn


def make_params(key):
    ks = jax.random.split(key, 8)
    f32 = jnp.float32
    return {
        "gamma": jnp.ones((1, D_MODEL), f32),
        "beta": jnp.zeros((1, D_MODEL), f32),
        "wq": 0.02 * jax.random.normal(ks[0], (D_MODEL, D_MODEL), f32),
        "bq": jnp.zeros((1, D_MODEL), f32),
        "wk": 0.02 * jax.random.normal(ks[1], (D_MODEL, D_MODEL), f32),
        "bk": jnp.zeros((1, D_MODEL), f32),
        "wv": 0.02 * jax.random.normal(ks[2], (D_MODEL, D_MODEL), f32),
        "bv": jnp.zeros((1, D_MODEL), f32),
        "wo": 0.02 * jax.random.normal(ks[3], (D_MODEL, D_MODEL), f32),
        "bo": jnp.zeros((1, D_MODEL), f32),
        "w1": 0.02 * jax.random.normal(ks[4], (D_MODEL, D_FF), f32),
        "b1": jnp.zeros((1, D_FF), f32),
        "w2": 0.02 * jax.random.normal(ks[5], (D_FF, D_MODEL), f32),
        "b2": jnp.zeros((1, D_MODEL), f32),
    }


if __name__ == "__main__":
    key = jax.random.PRNGKey(0)
    kx, kp = jax.random.split(key)
    x = jax.random.normal(kx, (B, S, D_MODEL), jnp.float32)
    # mask: 1 = attend, 0 = masked; mask out last two positions of batch 1.
    mask = jnp.ones((B, S, S), jnp.float32)
    mask = mask.at[1, :, S - 2:].set(0.0)
    params = make_params(kp)

    slab = jax.block_until_ready(prepare_params(params))   # one-time packing
    out = jax.block_until_ready(encoder_layer(x, mask, slab))
    ref = reference(x, mask, params)
    assert out.shape == (B, S, D_MODEL)
    # approx-reciprocal softmax (EUP) -> slightly looser tolerance than exact div.
    assert jnp.allclose(out, ref, atol=5e-4, rtol=5e-4), (
        f"max err {jnp.max(jnp.abs(out - ref))}"
    )
    print("KERNEL_OK")
</pallas_src>

<mosaic_0001>
module attributes {stable_mosaic.version = 11 : i64} {
  func.func @encoder_layer_kernel(%arg0: memref<16x32xf32, #tpu.memory_space<vmem>>, %arg1: memref<16x16xf32, #tpu.memory_space<vmem>>, %arg2: memref<168x128xf32, #tpu.memory_space<vmem>>, %arg3: memref<16x32xf32, #tpu.memory_space<vmem>>) attributes {dimension_semantics = [], scalar_prefetch = 0 : i64, scratch_operands = 0 : i64, tpu.core_type = #tpu.core_type<tc>} {
    %c0 = arith.constant 0 : index
    %c0_0 = arith.constant 0 : index
    %0 = vector.load %arg0[%c0, %c0_0] : memref<16x32xf32, #tpu.memory_space<vmem>>, vector<16x32xf32>
    %c0_1 = arith.constant 0 : index
    %c0_2 = arith.constant 0 : index
    %1 = vector.load %arg2[%c0_1, %c0_2] : memref<168x128xf32, #tpu.memory_space<vmem>>, vector<168x128xf32>
    %c0_3 = arith.constant 0 : index
    %c0_4 = arith.constant 0 : index
    %2 = vector.load %arg1[%c0_3, %c0_4] : memref<16x16xf32, #tpu.memory_space<vmem>>, vector<16x16xf32>
    %3 = vector.extract_strided_slice %1 {offsets = [160, 0], sizes = [1, 32], strides = [1, 1]} : vector<168x128xf32> to vector<1x32xf32>
    %4 = vector.extract_strided_slice %1 {offsets = [161, 0], sizes = [1, 32], strides = [1, 1]} : vector<168x128xf32> to vector<1x32xf32>
    %5 = vector.extract_strided_slice %1 {offsets = [0, 0], sizes = [32, 96], strides = [1, 1]} : vector<168x128xf32> to vector<32x96xf32>
    %6 = vector.extract_strided_slice %1 {offsets = [162, 0], sizes = [1, 96], strides = [1, 1]} : vector<168x128xf32> to vector<1x96xf32>
    %7 = vector.extract_strided_slice %1 {offsets = [32, 0], sizes = [32, 128], strides = [1, 1]} : vector<168x128xf32> to vector<32x128xf32>
    %8 = vector.extract_strided_slice %1 {offsets = [163, 0], sizes = [1, 32], strides = [1, 1]} : vector<168x128xf32> to vector<1x32xf32>
    %9 = vector.extract_strided_slice %1 {offsets = [64, 0], sizes = [32, 64], strides = [1, 1]} : vector<168x128xf32> to vector<32x64xf32>
    %10 = vector.extract_strided_slice %1 {offsets = [164, 0], sizes = [1, 64], strides = [1, 1]} : vector<168x128xf32> to vector<1x64xf32>
    %11 = vector.extract_strided_slice %1 {offsets = [96, 0], sizes = [64, 32], strides = [1, 1]} : vector<168x128xf32> to vector<64x32xf32>
    %12 = vector.extract_strided_slice %1 {offsets = [165, 0], sizes = [1, 32], strides = [1, 1]} : vector<168x128xf32> to vector<1x32xf32>
    %cst = arith.constant dense<0.000000e+00> : vector<16xf32>
    %13 = vector.multi_reduction <add>, %0, %cst [1] : vector<16x32xf32> to vector<16xf32>
    %14 = vector.shape_cast %13 : vector<16xf32> to vector<16x1xf32>
    %cst_5 = arith.constant 3.200000e+01 : f32
    %15 = vector.broadcast %cst_5 : f32 to vector<16x1xf32>
    %16 = arith.divf %14, %15 : vector<16x1xf32>
    %17 = vector.broadcast %16 : vector<16x1xf32> to vector<16x32xf32>
    %18 = arith.subf %0, %17 : vector<16x32xf32>
    %19 = arith.mulf %18, %18 : vector<16x32xf32>
    %cst_6 = arith.constant dense<0.000000e+00> : vector<16xf32>
    %20 = vector.multi_reduction <add>, %19, %cst_6 [1] : vector<16x32xf32> to vector<16xf32>
    %21 = vector.shape_cast %20 : vector<16xf32> to vector<16x1xf32>
    %cst_7 = arith.constant 3.200000e+01 : f32
    %22 = vector.broadcast %cst_7 : f32 to vector<16x1xf32>
    %23 = arith.divf %21, %22 : vector<16x1xf32>
    %24 = vector.broadcast %16 : vector<16x1xf32> to vector<16x32xf32>
    %25 = arith.subf %0, %24 : vector<16x32xf32>
    %cst_8 = arith.constant 3.200000e+01 : f32
    %26 = vector.broadcast %cst_8 : f32 to vector<16x1xf32>
    %27 = arith.addf %23, %26 : vector<16x1xf32>
    %28 = math.rsqrt %27 : vector<16x1xf32>
    %29 = vector.broadcast %28 : vector<16x1xf32> to vector<16x32xf32>
    %30 = arith.mulf %25, %29 : vector<16x32xf32>
    %31 = vector.broadcast %3 : vector<1x32xf32> to vector<16x32xf32>
    %32 = arith.mulf %30, %31 : vector<16x32xf32>
    %33 = vector.broadcast %4 : vector<1x32xf32> to vector<16x32xf32>
    %34 = arith.addf %32, %33 : vector<16x32xf32>
    %cst_9 = arith.constant dense<0.000000e+00> : vector<16x96xf32>
    %35 = tpu.matmul %34, %5, %cst_9 {dimension_numbers = #tpu.dot_dimension_numbers<[1], [0], [0], [1], [0, 0, 1, 1], [], []>} : vector<16x32xf32>, vector<32x96xf32>, vector<16x96xf32> -> vector<16x96xf32>
    %36 = vector.broadcast %6 : vector<1x96xf32> to vector<16x96xf32>
    %37 = arith.addf %35, %36 : vector<16x96xf32>
    %38 = vector.extract_strided_slice %37 {offsets = [0, 0], sizes = [16, 32], strides = [1, 1]} : vector<16x96xf32> to vector<16x32xf32>
    %39 = vector.extract_strided_slice %37 {offsets = [0, 32], sizes = [16, 32], strides = [1, 1]} : vector<16x96xf32> to vector<16x32xf32>
    %40 = vector.extract_strided_slice %37 {offsets = [0, 64], sizes = [16, 32], strides = [1, 1]} : vector<16x96xf32> to vector<16x32xf32>
    %cst_10 = arith.constant dense<0.000000e+00> : vector<16x128xf32>
    %41 = tpu.matmul %40, %7, %cst_10 {dimension_numbers = #tpu.dot_dimension_numbers<[1], [0], [0], [1], [0, 0, 1, 1], [], []>} : vector<16x32xf32>, vector<32x128xf32>, vector<16x128xf32> -> vector<16x128xf32>
    %42 = vector.extract_strided_slice %38 {offsets = [0, 0], sizes = [16, 8], strides = [1, 1]} : vector<16x32xf32> to vector<16x8xf32>
    %43 = vector.extract_strided_slice %39 {offsets = [0, 0], sizes = [16, 8], strides = [1, 1]} : vector<16x32xf32> to vector<16x8xf32>
    %cst_11 = arith.constant dense<0.000000e+00> : vector<16x16xf32>
    %44 = tpu.matmul %42, %43, %cst_11 {dimension_numbers = #tpu.dot_dimension_numbers<[1], [1], [0], [0], [0, 0, 1, 0], [], []>} : vector<16x8xf32>, vector<16x8xf32>, vector<16x16xf32> -> vector<16x16xf32>
    %45 = arith.addf %44, %2 : vector<16x16xf32>
    %cst_12 = arith.constant dense<0xFF800000> : vector<16xf32>
    %46 = vector.multi_reduction <maximumf>, %45, %cst_12 [1] : vector<16x16xf32> to vector<16xf32>
    %47 = vector.shape_cast %46 : vector<16xf32> to vector<16x1xf32>
    %48 = vector.broadcast %47 : vector<16x1xf32> to vector<16x16xf32>
    %49 = arith.subf %45, %48 : vector<16x16xf32>
    %50 = math.exp %49 : vector<16x16xf32>
    %cst_13 = arith.constant dense<0.000000e+00> : vector<16xf32>
    %51 = vector.multi_reduction <add>, %50, %cst_13 [1] : vector<16x16xf32> to vector<16xf32>
    %52 = vector.shape_cast %51 : vector<16xf32> to vector<16x1xf32>
    %53 = tpu.reciprocal %52 {approx = true} : vector<16x1xf32> -> vector<16x1xf32>
    %54 = vector.broadcast %53 : vector<16x1xf32> to vector<16x16xf32>
    %55 = arith.mulf %50, %54 : vector<16x16xf32>
    %56 = vector.extract_strided_slice %41 {offsets = [0, 0], sizes = [16, 32], strides = [1, 1]} : vector<16x128xf32> to vector<16x32xf32>
    %cst_14 = arith.constant dense<0.000000e+00> : vector<16x32xf32>
    %57 = tpu.matmul %55, %56, %cst_14 {dimension_numbers = #tpu.dot_dimension_numbers<[1], [0], [0], [1], [0, 0, 1, 1], [], []>} : vector<16x16xf32>, vector<16x32xf32>, vector<16x32xf32> -> vector<16x32xf32>
    %58 = vector.extract_strided_slice %38 {offsets = [0, 8], sizes = [16, 8], strides = [1, 1]} : vector<16x32xf32> to vector<16x8xf32>
    %59 = vector.extract_strided_slice %39 {offsets = [0, 8], sizes = [16, 8], strides = [1, 1]} : vector<16x32xf32> to vector<16x8xf32>
    %cst_15 = arith.constant dense<0.000000e+00> : vector<16x16xf32>
    %60 = tpu.matmul %58, %59, %cst_15 {dimension_numbers = #tpu.dot_dimension_numbers<[1], [1], [0], [0], [0, 0, 1, 0], [], []>} : vector<16x8xf32>, vector<16x8xf32>, vector<16x16xf32> -> vector<16x16xf32>
    %61 = arith.addf %60, %2 : vector<16x16xf32>
    %cst_16 = arith.constant dense<0xFF800000> : vector<16xf32>
    %62 = vector.multi_reduction <maximumf>, %61, %cst_16 [1] : vector<16x16xf32> to vector<16xf32>
    %63 = vector.shape_cast %62 : vector<16xf32> to vector<16x1xf32>
    %64 = vector.broadcast %63 : vector<16x1xf32> to vector<16x16xf32>
    %65 = arith.subf %61, %64 : vector<16x16xf32>
    %66 = math.exp %65 : vector<16x16xf32>
    %cst_17 = arith.constant dense<0.000000e+00> : vector<16xf32>
    %67 = vector.multi_reduction <add>, %66, %cst_17 [1] : vector<16x16xf32> to vector<16xf32>
    %68 = vector.shape_cast %67 : vector<16xf32> to vector<16x1xf32>
    %69 = tpu.reciprocal %68 {approx = true} : vector<16x1xf32> -> vector<16x1xf32>
    %70 = vector.broadcast %69 : vector<16x1xf32> to vector<16x16xf32>
    %71 = arith.mulf %66, %70 : vector<16x16xf32>
    %72 = vector.extract_strided_slice %41 {offsets = [0, 32], sizes = [16, 32], strides = [1, 1]} : vector<16x128xf32> to vector<16x32xf32>
    %cst_18 = arith.constant dense<0.000000e+00> : vector<16x32xf32>
    %73 = tpu.matmul %71, %72, %cst_18 {dimension_numbers = #tpu.dot_dimension_numbers<[1], [0], [0], [1], [0, 0, 1, 1], [], []>} : vector<16x16xf32>, vector<16x32xf32>, vector<16x32xf32> -> vector<16x32xf32>
    %74 = arith.addf %57, %73 : vector<16x32xf32>
    %75 = vector.extract_strided_slice %38 {offsets = [0, 16], sizes = [16, 8], strides = [1, 1]} : vector<16x32xf32> to vector<16x8xf32>
    %76 = vector.extract_strided_slice %39 {offsets = [0, 16], sizes = [16, 8], strides = [1, 1]} : vector<16x32xf32> to vector<16x8xf32>
    %cst_19 = arith.constant dense<0.000000e+00> : vector<16x16xf32>
    %77 = tpu.matmul %75, %76, %cst_19 {dimension_numbers = #tpu.dot_dimension_numbers<[1], [1], [0], [0], [0, 0, 1, 0], [], []>} : vector<16x8xf32>, vector<16x8xf32>, vector<16x16xf32> -> vector<16x16xf32>
    %78 = arith.addf %77, %2 : vector<16x16xf32>
    %cst_20 = arith.constant dense<0xFF800000> : vector<16xf32>
    %79 = vector.multi_reduction <maximumf>, %78, %cst_20 [1] : vector<16x16xf32> to vector<16xf32>
    %80 = vector.shape_cast %79 : vector<16xf32> to vector<16x1xf32>
    %81 = vector.broadcast %80 : vector<16x1xf32> to vector<16x16xf32>
    %82 = arith.subf %78, %81 : vector<16x16xf32>
    %83 = math.exp %82 : vector<16x16xf32>
    %cst_21 = arith.constant dense<0.000000e+00> : vector<16xf32>
    %84 = vector.multi_reduction <add>, %83, %cst_21 [1] : vector<16x16xf32> to vector<16xf32>
    %85 = vector.shape_cast %84 : vector<16xf32> to vector<16x1xf32>
    %86 = tpu.reciprocal %85 {approx = true} : vector<16x1xf32> -> vector<16x1xf32>
    %87 = vector.broadcast %86 : vector<16x1xf32> to vector<16x16xf32>
    %88 = arith.mulf %83, %87 : vector<16x16xf32>
    %89 = vector.extract_strided_slice %41 {offsets = [0, 64], sizes = [16, 32], strides = [1, 1]} : vector<16x128xf32> to vector<16x32xf32>
    %cst_22 = arith.constant dense<0.000000e+00> : vector<16x32xf32>
    %90 = tpu.matmul %88, %89, %cst_22 {dimension_numbers = #tpu.dot_dimension_numbers<[1], [0], [0], [1], [0, 0, 1, 1], [], []>} : vector<16x16xf32>, vector<16x32xf32>, vector<16x32xf32> -> vector<16x32xf32>
    %91 = arith.addf %74, %90 : vector<16x32xf32>
    %92 = vector.extract_strided_slice %38 {offsets = [0, 24], sizes = [16, 8], strides = [1, 1]} : vector<16x32xf32> to vector<16x8xf32>
    %93 = vector.extract_strided_slice %39 {offsets = [0, 24], sizes = [16, 8], strides = [1, 1]} : vector<16x32xf32> to vector<16x8xf32>
    %cst_23 = arith.constant dense<0.000000e+00> : vector<16x16xf32>
    %94 = tpu.matmul %92, %93, %cst_23 {dimension_numbers = #tpu.dot_dimension_numbers<[1], [1], [0], [0], [0, 0, 1, 0], [], []>} : vector<16x8xf32>, vector<16x8xf32>, vector<16x16xf32> -> vector<16x16xf32>
    %95 = arith.addf %94, %2 : vector<16x16xf32>
    %cst_24 = arith.constant dense<0xFF800000> : vector<16xf32>
    %96 = vector.multi_reduction <maximumf>, %95, %cst_24 [1] : vector<16x16xf32> to vector<16xf32>
    %97 = vector.shape_cast %96 : vector<16xf32> to vector<16x1xf32>
    %98 = vector.broadcast %97 : vector<16x1xf32> to vector<16x16xf32>
    %99 = arith.subf %95, %98 : vector<16x16xf32>
    %100 = math.exp %99 : vector<16x16xf32>
    %cst_25 = arith.constant dense<0.000000e+00> : vector<16xf32>
    %101 = vector.multi_reduction <add>, %100, %cst_25 [1] : vector<16x16xf32> to vector<16xf32>
    %102 = vector.shape_cast %101 : vector<16xf32> to vector<16x1xf32>
    %103 = tpu.reciprocal %102 {approx = true} : vector<16x1xf32> -> vector<16x1xf32>
    %104 = vector.broadcast %103 : vector<16x1xf32> to vector<16x16xf32>
    %105 = arith.mulf %100, %104 : vector<16x16xf32>
    %106 = vector.extract_strided_slice %41 {offsets = [0, 96], sizes = [16, 32], strides = [1, 1]} : vector<16x128xf32> to vector<16x32xf32>
    %cst_26 = arith.constant dense<0.000000e+00> : vector<16x32xf32>
    %107 = tpu.matmul %105, %106, %cst_26 {dimension_numbers = #tpu.dot_dimension_numbers<[1], [0], [0], [1], [0, 0, 1, 1], [], []>} : vector<16x16xf32>, vector<16x32xf32>, vector<16x32xf32> -> vector<16x32xf32>
    %108 = arith.addf %91, %107 : vector<16x32xf32>
    %109 = arith.addf %0, %108 : vector<16x32xf32>
    %110 = vector.broadcast %8 : vector<1x32xf32> to vector<16x32xf32>
    %111 = arith.addf %109, %110 : vector<16x32xf32>
    %cst_27 = arith.constant dense<0.000000e+00> : vector<16xf32>
    %112 = vector.multi_reduction <add>, %111, %cst_27 [1] : vector<16x32xf32> to vector<16xf32>
    %113 = vector.shape_cast %112 : vector<16xf32> to vector<16x1xf32>
    %cst_28 = arith.constant 3.200000e+01 : f32
    %114 = vector.broadcast %cst_28 : f32 to vector<16x1xf32>
    %115 = arith.divf %113, %114 : vector<16x1xf32>
    %116 = vector.broadcast %115 : vector<16x1xf32> to vector<16x32xf32>
    %117 = arith.subf %111, %116 : vector<16x32xf32>
    %118 = arith.mulf %117, %117 : vector<16x32xf32>
    %cst_29 = arith.constant dense<0.000000e+00> : vector<16xf32>
    %119 = vector.multi_reduction <add>, %118, %cst_29 [1] : vector<16x32xf32> to vector<16xf32>
    %120 = vector.shape_cast %119 : vector<16xf32> to vector<16x1xf32>
    %cst_30 = arith.constant 3.200000e+01 : f32
    %121 = vector.broadcast %cst_30 : f32 to vector<16x1xf32>
    %122 = arith.divf %120, %121 : vector<16x1xf32>
    %123 = vector.broadcast %115 : vector<16x1xf32> to vector<16x32xf32>
    %124 = arith.subf %111, %123 : vector<16x32xf32>
    %cst_31 = arith.constant 3.200000e+01 : f32
    %125 = vector.broadcast %cst_31 : f32 to vector<16x1xf32>
    %126 = arith.addf %122, %125 : vector<16x1xf32>
    %127 = math.rsqrt %126 : vector<16x1xf32>
    %128 = vector.broadcast %127 : vector<16x1xf32> to vector<16x32xf32>
    %129 = arith.mulf %124, %128 : vector<16x32xf32>
    %130 = vector.broadcast %3 : vector<1x32xf32> to vector<16x32xf32>
    %131 = arith.mulf %129, %130 : vector<16x32xf32>
    %132 = vector.broadcast %4 : vector<1x32xf32> to vector<16x32xf32>
    %133 = arith.addf %131, %132 : vector<16x32xf32>
    %cst_32 = arith.constant dense<0.000000e+00> : vector<16x64xf32>
    %134 = tpu.matmul %133, %9, %cst_32 {dimension_numbers = #tpu.dot_dimension_numbers<[1], [0], [0], [1], [0, 0, 1, 1], [], []>} : vector<16x32xf32>, vector<32x64xf32>, vector<16x64xf32> -> vector<16x64xf32>
    %135 = vector.broadcast %10 : vector<1x64xf32> to vector<16x64xf32>
    %136 = arith.addf %134, %135 : vector<16x64xf32>
    %cst_33 = arith.constant 0.000000e+00 : f32
    %137 = vector.broadcast %cst_33 : f32 to vector<16x64xf32>
    %138 = arith.maximumf %136, %137 : vector<16x64xf32>
    %cst_34 = arith.constant dense<0.000000e+00> : vector<16x32xf32>
    %139 = tpu.matmul %138, %11, %cst_34 {dimension_numbers = #tpu.dot_dimension_numbers<[1], [0], [0], [1], [0, 0, 1, 1], [], []>} : vector<16x64xf32>, vector<64x32xf32>, vector<16x32xf32> -> vector<16x32xf32>
    %140 = vector.broadcast %12 : vector<1x32xf32> to vector<16x32xf32>
    %141 = arith.addf %139, %140 : vector<16x32xf32>
    %142 = arith.addf %111, %141 : vector<16x32xf32>
    %c0_35 = arith.constant 0 : index
    %c0_36 = arith.constant 0 : index
    %143 = vector.load %arg3[%c0_35, %c0_36] : memref<16x32xf32, #tpu.memory_space<vmem>>, vector<16x32xf32>
    tpu.vector_store %arg3[%c0_35, %c0_36], %142 {strides = array<i32>} : memref<16x32xf32, #tpu.memory_space<vmem>>, vector<16x32xf32>,
    return
  }
}

</mosaic_0001>

<llo_original>
// kernel: encoder_layer.1
$region0: #{encoder_layer.1}
  #allocation0 [shape = 'u32[]', space=smem, size = 0x4, offset = 0x4, fixed_abs, tag = 'smem constant byte address 0x4 - core index']
  #allocation1 [shape = 'u32[144,128]{1,0:T(1,128)}', space=vmem, size = 0x12000, scoped, tag = 'internal scratch']
  %s0 = inlined_call_operand.vmem [shape: f32[16,32], index: 0, kind: input, shape index: {}]
  %s1 = inlined_call_operand.vmem [shape: f32[16,16], index: 1, kind: input, shape index: {}]
  %s2 = inlined_call_operand.hbm [shape: f32[168,128], index: 2, kind: input, shape index: {}]
  %s3 = inlined_call_operand.hbm [shape: f32[16,32], index: 3, kind: output, shape index: {}]
  %s4 = sld [smem:[#allocation0]]
  $region26: #{encoder_layer.1} parent=0
    _
  %s6 = ssub.s32 1, %s4
  %s7 = scalar_select 0, %s6, %s4
  $region1: #{encoder_layer.1} parent=0
    #allocation2 [shape = 'u8[86016]{0}', space=vmem, size = 0x15000, scoped, tag = 'input window, operand 2, single buffered']
    #allocation3 [shape = 's32[1]{0}', space=sflag, size = 0x4, scoped, tag = 'scoped memory for encoder_layer.1']
    #allocation4 [shape = 's32[1]{0}', space=sflag, size = 0x4, scoped, tag = 'scoped memory for encoder_layer.1']
    #allocation5 [shape = 'u8[8192]{0}', space=vmem, size = 0x2000, scoped, tag = 'output window, operand 0, single buffered']
    %8 = vsyncpa [#allocation3], 0
    %9 = vsyncpa [#allocation4], 0
    // Predicated region
    $region2: #{encoder_layer.1} parent=1 // pred_check
      _
    $region3: #{encoder_layer.1} parent=1 // pred_check_branch
      %11 = sbr.rel (0) target = $region5
    $region4: #{encoder_layer.1} parent=1 // pred_region
      _
    $region5: #{encoder_layer.1} parent=1 // pred_fallthru
      _
    // Predicated region
    $region6: #{encoder_layer.1} parent=1 // pred_check
      _
    $region7: #{encoder_layer.1} parent=1 // pred_check_branch
      %13 = sbr.rel (0) target = $region9
    $region8: #{encoder_layer.1} parent=1 // pred_region
      _
    $region9: #{encoder_layer.1} parent=1 // pred_fallthru
      _
    // Predicated region
    $region10: #{encoder_layer.1} parent=1 // pred_check
      _
    $region11: #{encoder_layer.1} parent=1 // pred_check_branch
      %15 = sbr.rel (0) target = $region13
    $region12: #{encoder_layer.1} parent=1 // pred_region
      %s17 = ssub.s32 2688, 2688
      %18 = vsyncadd [#allocation3], %s17
      %s19 = sshll.u32 [#allocation2], 4
      %s20 = int_to_ptr.vmem [resolvable:$true] %s19
      %25 = dma.hbm_to_vmem [thread:$0]  %s2, 2688, %s20, [#allocation3], 128, 128, 8
    $region13: #{encoder_layer.1} parent=1 // pred_fallthru
      _
    // Predicated region
    $region14: #{encoder_layer.1} parent=1 // pred_check
      _
    $region15: #{encoder_layer.1} parent=1 // pred_check_branch
      %27 = sbr.rel (0) target = $region17
    $region16: #{encoder_layer.1} parent=1 // pred_region
      %28 = dma.done [#allocation3], 2688
    $region17: #{encoder_layer.1} parent=1 // pred_fallthru
      _
    %v29 = vld [vmem:[%s0] sm:$0xff]
    %v30 = vld [vmem:[%s0 + $0x8] sm:$0xff]
    %v31 = vld [vmem:[#allocation2] sm:$0xff]
    %v32 = vld [vmem:[#allocation2 + $0x8] sm:$0xff]
    %v33 = vld [vmem:[#allocation2 + $0x10] sm:$0xff]
    %v34 = vld [vmem:[#allocation2 + $0x18] sm:$0xff]
    %v35 = vld [vmem:[#allocation2 + $0x20] sm:$0xff]
    %v36 = vld [vmem:[#allocation2 + $0x28] sm:$0xff]
    %v37 = vld [vmem:[#allocation2 + $0x30] sm:$0xff]
    %v38 = vld [vmem:[#allocation2 + $0x38] sm:$0xff]
    %v39 = vld [vmem:[#allocation2 + $0x40] sm:$0xff]
    %v40 = vld [vmem:[#allocation2 + $0x48] sm:$0xff]
    %v41 = vld [vmem:[#allocation2 + $0x50] sm:$0xff]
    %v42 = vld [vmem:[#allocation2 + $0x58] sm:$0xff]
    %v43 = vld [vmem:[#allocation2 + $0x60] sm:$0xff]
    %v44 = vld [vmem:[#allocation2 + $0x68] sm:$0xff]
    %v45 = vld [vmem:[#allocation2 + $0x70] sm:$0xff]
    %v46 = vld [vmem:[#allocation2 + $0x78] sm:$0xff]
    %v47 = vld [vmem:[#allocation2 + $0x80] sm:$0xff]
    %v48 = vld [vmem:[#allocation2 + $0x88] sm:$0xff]
    %v49 = vld [vmem:[#allocation2 + $0x90] sm:$0xff]
    %v50 = vld [vmem:[#allocation2 + $0x98] sm:$0xff]
    %v51 = vld [vmem:[#allocation2 + $0xa0] sm:$0xff]
    %v52 = vld [vmem:[%s1] sm:$0xff]
    %v53 = vld [vmem:[%s1 + $0x8] sm:$0xff]
    %vm54 = vcmask 261120
    %v55 = vsel %vm54, %v29, 0.0
    %56 = vadd.xlane.f32.xlu0 %v55
    %v57 = vpop.xlane.xlu0 %56
    %v58 = vsel %vm54, %v30, 0.0
    %59 = vadd.xlane.f32.xlu0 %v58
    %v60 = vpop.xlane.xlu0 %59
    %v61 = vrcp.pop 32.0
    %v62 = vmul.f32 %v57, %v61
    %v63 = vmul.f32 %v60, %v61
    %v64 = vsub.f32 %v29, %v62
    %v65 = vsub.f32 %v30, %v63
    %v66 = vmul.f32 %v64, %v64
    %v67 = vmul.f32 %v65, %v65
    %v68 = vsel %vm54, %v66, 0.0
    %69 = vadd.xlane.f32.xlu0 %v68
    %v70 = vpop.xlane.xlu0 %69
    %v71 = vsel %vm54, %v67, 0.0
    %72 = vadd.xlane.f32.xlu0 %v71
    %v73 = vpop.xlane.xlu0 %72
    %v74 = vmul.f32 %v70, %v61
    %v75 = vmul.f32 %v73, %v61
    %v76 = vadd.f32 %v74, 32.0
    %v77 = vadd.f32 %v75, 32.0
    %v78 = vrsqrt.pop %v76
    %v79 = vrsqrt.pop %v77
    %v80 = vmul.f32 %v64, %v78
    %v81 = vmul.f32 %v65, %v79
    %v82 = vlaneseq
    %v83 = vshrl.u32 %v82, 7
    %v84 = vsub.s32 0, %v83
    %v85 = vrot.slane %v51, %v84
    %v86 = vmul.f32 %v80, %v85
    %v87 = vmul.f32 %v81, %v85
    %v88 = vlaneseq
    %v89 = vshrl.u32 %v88, 7
    %v90 = vsub.s32 1, %v89
    %v91 = vrot.slane %v51, %v90
    %v92 = vadd.f32 %v86, %v91
    %v93 = vadd.f32 %v87, %v91
    %v94 = vlaneseq
    %v95 = vshrl.u32 %v94, 7
    %v96 = vsub.s32 2, %v95
    %v97 = vrot.slane %v51, %v96
    %v99 = vsel %vm54, %v92, 0
    %v102 = vsel %vm54, %v93, 0
    %104 = vmatprep.subr.mxu0 0.0
    %105 = vmatpush1.msra.mxu0 %v31
    %106 = vmatprep.subr.mxu0 0.0
    %107 = vmatpush1.msra.mxu0 %v32
    %108 = vmatprep.subr.mxu0 0.0
    %109 = vmatpush1.msra.mxu0 %v33
    %110 = vmatprep.subr.mxu0 0.0
    %111 = vmatpush1.msra.mxu0 %v34
    %112 = vmatprep.subr.mxu0 0.0
    %113 = vmatpush1.msra.mxu0 0.0
    %114 = vmatprep.subr.mxu0 0.0
    %115 = vmatpush1.msra.mxu0 0.0
    %116 = vmatprep.subr.mxu0 0.0
    %117 = vmatpush1.msra.mxu0 0.0
    %118 = vmatprep.subr.mxu0 0.0
    %119 = vmatpush1.msra.mxu0 0.0
    %120 = vmatprep.subr.mxu0 0.0
    %121 = vmatpush1.msra.mxu0 0.0
    %122 = vmatprep.subr.mxu0 0.0
    %123 = vmatpush1.msra.mxu0 0.0
    %124 = vmatprep.subr.mxu0 0.0
    %125 = vmatpush1.msra.mxu0 0.0
    %126 = vmatprep.subr.mxu0 0.0
    %127 = vmatpush1.msra.mxu0 0.0
    %128 = vmatprep.subr.mxu0 0.0
    %129 = vmatpush1.msra.mxu0 0.0
    %130 = vmatprep.subr.mxu0 0.0
    %131 = vmatpush1.msra.mxu0 0.0
    %132 = vmatprep.subr.mxu0 0.0
    %133 = vmatpush1.msra.mxu0 0.0
    %134 = vmatprep.subr.mxu0 0.0
    %135 = vmatpush1.msra.mxu0 0.0
    %136 = vmatprep.subr.mxu0 0.0
    %137 = vmatpush1.msra.mxu0 0.0
    %138 = vmatprep.subr.mxu0 0.0
    %139 = vmatpush1.msra.mxu0 0.0
    %140 = vmatprep.subr.mxu0 0.0
    %141 = vmatpush1.msra.mxu0 0.0
    %142 = vmatprep.subr.mxu0 0.0
    %143 = vmatpush1.msra.mxu0 0.0
    %144 = vmatprep.subr.mxu0 0.0
    %145 = vmatpush1.msra.mxu0 0.0
    %146 = vmatprep.subr.mxu0 0.0
    %147 = vmatpush1.msra.mxu0 0.0
    %148 = vmatprep.subr.mxu0 0.0
    %149 = vmatpush1.msra.mxu0 0.0
    %150 = vmatprep.subr.mxu0 0.0
    %151 = vmatpush1.msra.mxu0 0.0
    %152 = vmatprep.subr.mxu0 0.0
    %153 = vmatpush1.msra.mxu0 0.0
    %154 = vmatprep.subr.mxu0 0.0
    %155 = vmatpush1.msra.mxu0 0.0
    %156 = vmatprep.subr.mxu0 0.0
    %157 = vmatpush1.msra.mxu0 0.0
    %158 = vmatprep.subr.mxu0 0.0
    %159 = vmatpush1.msra.mxu0 0.0
    %160 = vmatprep.subr.mxu0 0.0
    %161 = vmatpush1.msra.mxu0 0.0
    %162 = vmatprep.subr.mxu0 0.0
    %163 = vmatpush1.msra.mxu0 0.0
    %164 = vmatprep.subr.mxu0 0.0
    %165 = vmatpush1.msra.mxu0 0.0
    %166 = vmatprep.subr.mxu0 0.0
    %167 = vmatpush1.msra.mxu0 0.0
    %168 = vmatprep.mubr.f32.mxu0 0.0
    %169 = vmatmul.mubr.f32.gmra.mrb[0].mxu0 %v99
    %v170 = vpop.f32.mrb[0].mxu0
    %v171 = vadd.f32 %v97, %v170
    %v172 = vpop.f32.mrb[0].mxu0
    %173 = vmatprep.mubr.f32.mxu0 0.0
    %174 = vmatmul.mubr.f32.gmra.mrb[0].mxu0 %v102
    %v175 = vpop.f32.mrb[0].mxu0
    %v176 = vadd.f32 %v97, %v175
    %v177 = vpop.f32.mrb[0].mxu0
    %178 = vdwg.mxu0
    %181 = vrot.lane.b32.xlu0 %v171, 64
    %v182 = vpop.permute.xlu0 %181
    %183 = vrot.lane.b32.xlu0 %v176, 64
    %v184 = vpop.permute.xlu0 %183
    %v185 = vsel %vm54, %v182, 0
    %v187 = vsel %vm54, %v184, 0
    %189 = vmatprep.subr.mxu0 0.0
    %190 = vmatpush1.msra.mxu0 %v35
    %191 = vmatprep.subr.mxu0 0.0
    %192 = vmatpush1.msra.mxu0 %v36
    %193 = vmatprep.subr.mxu0 0.0
    %194 = vmatpush1.msra.mxu0 %v37
    %195 = vmatprep.subr.mxu0 0.0
    %196 = vmatpush1.msra.mxu0 %v38
    %197 = vmatprep.subr.mxu0 0.0
    %198 = vmatpush1.msra.mxu0 0.0
    %199 = vmatprep.subr.mxu0 0.0
    %200 = vmatpush1.msra.mxu0 0.0
    %201 = vmatprep.subr.mxu0 0.0
    %202 = vmatpush1.msra.mxu0 0.0
    %203 = vmatprep.subr.mxu0 0.0
    %204 = vmatpush1.msra.mxu0 0.0
    %205 = vmatprep.subr.mxu0 0.0
    %206 = vmatpush1.msra.mxu0 0.0
    %207 = vmatprep.subr.mxu0 0.0
    %208 = vmatpush1.msra.mxu0 0.0
    %209 = vmatprep.subr.mxu0 0.0
    %210 = vmatpush1.msra.mxu0 0.0
    %211 = vmatprep.subr.mxu0 0.0
    %212 = vmatpush1.msra.mxu0 0.0
    %213 = vmatprep.subr.mxu0 0.0
    %214 = vmatpush1.msra.mxu0 0.0
    %215 = vmatprep.subr.mxu0 0.0
    %216 = vmatpush1.msra.mxu0 0.0
    %217 = vmatprep.subr.mxu0 0.0
    %218 = vmatpush1.msra.mxu0 0.0
    %219 = vmatprep.subr.mxu0 0.0
    %220 = vmatpush1.msra.mxu0 0.0
    %221 = vmatprep.subr.mxu0 0.0
    %222 = vmatpush1.msra.mxu0 0.0
    %223 = vmatprep.subr.mxu0 0.0
    %224 = vmatpush1.msra.mxu0 0.0
    %225 = vmatprep.subr.mxu0 0.0
    %226 = vmatpush1.msra.mxu0 0.0
    %227 = vmatprep.subr.mxu0 0.0
    %228 = vmatpush1.msra.mxu0 0.0
    %229 = vmatprep.subr.mxu0 0.0
    %230 = vmatpush1.msra.mxu0 0.0
    %231 = vmatprep.subr.mxu0 0.0
    %232 = vmatpush1.msra.mxu0 0.0
    %233 = vmatprep.subr.mxu0 0.0
    %234 = vmatpush1.msra.mxu0 0.0
    %235 = vmatprep.subr.mxu0 0.0
    %236 = vmatpush1.msra.mxu0 0.0
    %237 = vmatprep.subr.mxu0 0.0
    %238 = vmatpush1.msra.mxu0 0.0
    %239 = vmatprep.subr.mxu0 0.0
    %240 = vmatpush1.msra.mxu0 0.0
    %241 = vmatprep.subr.mxu0 0.0
    %242 = vmatpush1.msra.mxu0 0.0
    %243 = vmatprep.subr.mxu0 0.0
    %244 = vmatpush1.msra.mxu0 0.0
    %245 = vmatprep.subr.mxu0 0.0
    %246 = vmatpush1.msra.mxu0 0.0
    %247 = vmatprep.subr.mxu0 0.0
    %248 = vmatpush1.msra.mxu0 0.0
    %249 = vmatprep.subr.mxu0 0.0
    %250 = vmatpush1.msra.mxu0 0.0
    %251 = vmatprep.subr.mxu0 0.0
    %252 = vmatpush1.msra.mxu0 0.0
    %253 = vmatprep.mubr.f32.mxu0 0.0
    %254 = vmatmul.mubr.f32.gmra.mrb[0].mxu0 %v185
    %v255 = vpop.f32.mrb[0].mxu0
    %v256 = vadd.f32 0.0, %v255
    %v257 = vpop.f32.mrb[0].mxu0
    %258 = vmatprep.mubr.f32.mxu0 0.0
    %259 = vmatmul.mubr.f32.gmra.mrb[0].mxu0 %v187
    %v260 = vpop.f32.mrb[0].mxu0
    %v261 = vadd.f32 0.0, %v260
    %v262 = vpop.f32.mrb[0].mxu0
    %263 = vdwg.mxu0
    %264 = vrot.lane.b32.xlu0 %v171, 96
    %v265 = vpop.permute.xlu0 %264
    %266 = vrot.lane.b32.xlu0 %v176, 96
    %v267 = vpop.permute.xlu0 %266
    %vm268 = vcmask 64512
    %v269 = vsel %vm268, %v171, 0
    %v271 = vsel %vm268, %v176, 0
    %v273 = vsel %vm268, %v265, 0
    %v275 = vsel %vm268, %v267, 0
    %277 = vmatprep.subr.mxu0 0.0
    %278 = vmatpush1.xpose.msra.mxu0 %v273
    %279 = vmatprep.subr.mxu0 0.0
    %280 = vmatpush1.xpose.msra.mxu0 %v275
    %281 = vmatprep.subr.mxu0 0.0
    %282 = vmatpush1.xpose.msra.mxu0 0.0
    %283 = vmatprep.subr.mxu0 0.0
    %284 = vmatpush1.xpose.msra.mxu0 0.0
    %285 = vmatprep.subr.mxu0 0.0
    %286 = vmatpush1.xpose.msra.mxu0 0.0
    %287 = vmatprep.subr.mxu0 0.0
    %288 = vmatpush1.xpose.msra.mxu0 0.0
    %289 = vmatprep.subr.mxu0 0.0
    %290 = vmatpush1.xpose.msra.mxu0 0.0
    %291 = vmatprep.subr.mxu0 0.0
    %292 = vmatpush1.xpose.msra.mxu0 0.0
    %293 = vmatprep.subr.mxu0 0.0
    %294 = vmatpush1.xpose.msra.mxu0 0.0
    %295 = vmatprep.subr.mxu0 0.0
    %296 = vmatpush1.xpose.msra.mxu0 0.0
    %297 = vmatprep.subr.mxu0 0.0
    %298 = vmatpush1.xpose.msra.mxu0 0.0
    %299 = vmatprep.subr.mxu0 0.0
    %300 = vmatpush1.xpose.msra.mxu0 0.0
    %301 = vmatprep.subr.mxu0 0.0
    %302 = vmatpush1.xpose.msra.mxu0 0.0
    %303 = vmatprep.subr.mxu0 0.0
    %304 = vmatpush1.xpose.msra.mxu0 0.0
    %305 = vmatprep.subr.mxu0 0.0
    %306 = vmatpush1.xpose.msra.mxu0 0.0
    %307 = vmatprep.subr.mxu0 0.0
    %308 = vmatpush1.xpose.msra.mxu0 0.0
    %309 = vmatprep.subr.mxu0 0.0
    %310 = vmatpush1.xpose.msra.mxu0 0.0
    %311 = vmatprep.subr.mxu0 0.0
    %312 = vmatpush1.xpose.msra.mxu0 0.0
    %313 = vmatprep.subr.mxu0 0.0
    %314 = vmatpush1.xpose.msra.mxu0 0.0
    %315 = vmatprep.subr.mxu0 0.0
    %316 = vmatpush1.xpose.msra.mxu0 0.0
    %317 = vmatprep.subr.mxu0 0.0
    %318 = vmatpush1.xpose.msra.mxu0 0.0
    %319 = vmatprep.subr.mxu0 0.0
    %320 = vmatpush1.xpose.msra.mxu0 0.0
    %321 = vmatprep.subr.mxu0 0.0
    %322 = vmatpush1.xpose.msra.mxu0 0.0
    %323 = vmatprep.subr.mxu0 0.0
    %324 = vmatpush1.xpose.msra.mxu0 0.0
    %325 = vmatprep.subr.mxu0 0.0
    %326 = vmatpush1.xpose.msra.mxu0 0.0
    %327 = vmatprep.subr.mxu0 0.0
    %328 = vmatpush1.xpose.msra.mxu0 0.0
    %329 = vmatprep.subr.mxu0 0.0
    %330 = vmatpush1.xpose.msra.mxu0 0.0
    %331 = vmatprep.subr.mxu0 0.0
    %332 = vmatpush1.xpose.msra.mxu0 0.0
    %333 = vmatprep.subr.mxu0 0.0
    %334 = vmatpush1.xpose.msra.mxu0 0.0
    %335 = vmatprep.subr.mxu0 0.0
    %336 = vmatpush1.xpose.msra.mxu0 0.0
    %337 = vmatprep.subr.mxu0 0.0
    %338 = vmatpush1.xpose.msra.mxu0 0.0
    %339 = vmatprep.subr.mxu0 0.0
    %340 = vmatpush1.xpose.msra.mxu0 0.0
    %341 = vmatprep.mubr.f32.mxu0 0.0
    %342 = vmatmul.mubr.f32.gmra.mrb[0].mxu0 %v269
    %v343 = vpop.f32.mrb[0].mxu0
    %v344 = vadd.f32 %v52, %v343
    %v345 = vpop.f32.mrb[0].mxu0
    %346 = vmatprep.mubr.f32.mxu0 0.0
    %347 = vmatmul.mubr.f32.gmra.mrb[0].mxu0 %v271
    %v348 = vpop.f32.mrb[0].mxu0
    %v349 = vadd.f32 %v53, %v348
    %v350 = vpop.f32.mrb[0].mxu0
    %351 = vdwg.mxu0
    %vm352 = vcmask 130048
    %v353 = vsel %vm352, %v344, -inf
    %354 = vmax.xlane.f32.xlu0 %v353
    %v355 = vpop.xlane.xlu0 %354
    %v356 = vsel %vm352, %v349, -inf
    %357 = vmax.xlane.f32.xlu0 %v356
    %v358 = vpop.xlane.xlu0 %357
    %v359 = vsub.f32 %v344, %v355
    %v360 = vsub.f32 %v349, %v358
    %v361 = vmul.f32 %v359, 1.442695
    %v362 = vpow.pop %v361
    %v363 = vmul.f32 %v360, 1.442695
    %v364 = vpow.pop %v363
    %v365 = vsel %vm352, %v362, 0.0
    %366 = vadd.xlane.f32.xlu0 %v365
    %v367 = vpop.xlane.xlu0 %366
    %v368 = vsel %vm352, %v364, 0.0
    %369 = vadd.xlane.f32.xlu0 %v368
    %v370 = vpop.xlane.xlu0 %369
    %v371 = vrcp.pop %v367
    %v372 = vrcp.pop %v370
    %v373 = vmul.f32 %v362, %v371
    %v374 = vmul.f32 %v364, %v372
    %375 = vrot.lane.b32.xlu0 %v171, 120
    %v376 = vpop.permute.xlu0 %375
    %377 = vrot.lane.b32.xlu0 %v176, 120
    %v378 = vpop.permute.xlu0 %377
    %379 = vrot.lane.b32.xlu0 %v171, 88
    %v380 = vpop.permute.xlu0 %379
    %381 = vrot.lane.b32.xlu0 %v176, 88
    %v382 = vpop.permute.xlu0 %381
    %v383 = vsel %vm268, %v376, 0
    %v385 = vsel %vm268, %v378, 0
    %v387 = vsel %vm268, %v380, 0
    %v389 = vsel %vm268, %v382, 0
    %391 = vmatprep.subr.mxu0 0.0
    %392 = vmatpush1.xpose.msra.mxu0 %v387
    %393 = vmatprep.subr.mxu0 0.0
    %394 = vmatpush1.xpose.msra.mxu0 %v389
    %395 = vmatprep.subr.mxu0 0.0
    %396 = vmatpush1.xpose.msra.mxu0 0.0
    %397 = vmatprep.subr.mxu0 0.0
    %398 = vmatpush1.xpose.msra.mxu0 0.0
    %399 = vmatprep.subr.mxu0 0.0
    %400 = vmatpush1.xpose.msra.mxu0 0.0
    %401 = vmatprep.subr.mxu0 0.0
    %402 = vmatpush1.xpose.msra.mxu0 0.0
    %403 = vmatprep.subr.mxu0 0.0
    %404 = vmatpush1.xpose.msra.mxu0 0.0
    %405 = vmatprep.subr.mxu0 0.0
    %406 = vmatpush1.xpose.msra.mxu0 0.0
    %407 = vmatprep.subr.mxu0 0.0
    %408 = vmatpush1.xpose.msra.mxu0 0.0
    %409 = vmatprep.subr.mxu0 0.0
    %410 = vmatpush1.xpose.msra.mxu0 0.0
    %411 = vmatprep.subr.mxu0 0.0
    %412 = vmatpush1.xpose.msra.mxu0 0.0
    %413 = vmatprep.subr.mxu0 0.0
    %414 = vmatpush1.xpose.msra.mxu0 0.0
    %415 = vmatprep.subr.mxu0 0.0
    %416 = vmatpush1.xpose.msra.mxu0 0.0
    %417 = vmatprep.subr.mxu0 0.0
    %418 = vmatpush1.xpose.msra.mxu0 0.0
    %419 = vmatprep.subr.mxu0 0.0
    %420 = vmatpush1.xpose.msra.mxu0 0.0
    %421 = vmatprep.subr.mxu0 0.0
    %422 = vmatpush1.xpose.msra.mxu0 0.0
    %423 = vmatprep.subr.mxu0 0.0
    %424 = vmatpush1.xpose.msra.mxu0 0.0
    %425 = vmatprep.subr.mxu0 0.0
    %426 = vmatpush1.xpose.msra.mxu0 0.0
    %427 = vmatprep.subr.mxu0 0.0
    %428 = vmatpush1.xpose.msra.mxu0 0.0
    %429 = vmatprep.subr.mxu0 0.0
    %430 = vmatpush1.xpose.msra.mxu0 0.0
    %431 = vmatprep.subr.mxu0 0.0
    %432 = vmatpush1.xpose.msra.mxu0 0.0
    %433 = vmatprep.subr.mxu0 0.0
    %434 = vmatpush1.xpose.msra.mxu0 0.0
    %435 = vmatprep.subr.mxu0 0.0
    %436 = vmatpush1.xpose.msra.mxu0 0.0
    %437 = vmatprep.subr.mxu0 0.0
    %438 = vmatpush1.xpose.msra.mxu0 0.0
    %439 = vmatprep.subr.mxu0 0.0
    %440 = vmatpush1.xpose.msra.mxu0 0.0
    %441 = vmatprep.subr.mxu0 0.0
    %442 = vmatpush1.xpose.msra.mxu0 0.0
    %443 = vmatprep.subr.mxu0 0.0
    %444 = vmatpush1.xpose.msra.mxu0 0.0
    %445 = vmatprep.subr.mxu0 0.0
    %446 = vmatpush1.xpose.msra.mxu0 0.0
    %447 = vmatprep.subr.mxu0 0.0
    %448 = vmatpush1.xpose.msra.mxu0 0.0
    %449 = vmatprep.subr.mxu0 0.0
    %450 = vmatpush1.xpose.msra.mxu0 0.0
    %451 = vmatprep.subr.mxu0 0.0
    %452 = vmatpush1.xpose.msra.mxu0 0.0
    %453 = vmatprep.subr.mxu0 0.0
    %454 = vmatpush1.xpose.msra.mxu0 0.0
    %455 = vmatprep.mubr.f32.mxu0 0.0
    %456 = vmatmul.mubr.f32.gmra.mrb[0].mxu0 %v383
    %v457 = vpop.f32.mrb[0].mxu0
    %v458 = vadd.f32 %v52, %v457
    %v459 = vpop.f32.mrb[0].mxu0
    %460 = vmatprep.mubr.f32.mxu0 0.0
    %461 = vmatmul.mubr.f32.gmra.mrb[0].mxu0 %v385
    %v462 = vpop.f32.mrb[0].mxu0
    %v463 = vadd.f32 %v53, %v462
    %v464 = vpop.f32.mrb[0].mxu0
    %465 = vdwg.mxu0
    %v466 = vsel %vm352, %v458, -inf
    %467 = vmax.xlane.f32.xlu0 %v466
    %v468 = vpop.xlane.xlu0 %467
    %v469 = vsel %vm352, %v463, -inf
    %470 = vmax.xlane.f32.xlu0 %v469
    %v471 = vpop.xlane.xlu0 %470
    %v472 = vsub.f32 %v458, %v468
    %v473 = vsub.f32 %v463, %v471
    %v474 = vmul.f32 %v472, 1.442695
    %v475 = vpow.pop %v474
    %v476 = vmul.f32 %v473, 1.442695
    %v477 = vpow.pop %v476
    %v478 = vsel %vm352, %v475, 0.0
    %479 = vadd.xlane.f32.xlu0 %v478
    %v480 = vpop.xlane.xlu0 %479
    %v481 = vsel %vm352, %v477, 0.0
    %482 = vadd.xlane.f32.xlu0 %v481
    %v483 = vpop.xlane.xlu0 %482
    %v484 = vrcp.pop %v480
    %v485 = vrcp.pop %v483
    %v486 = vmul.f32 %v475, %v484
    %v487 = vmul.f32 %v477, %v485
    %490 = vrot.lane.b32.xlu0 %v256, 96
    %v491 = vpop.permute.xlu0 %490
    %492 = vrot.lane.b32.xlu0 %v261, 96
    %v493 = vpop.permute.xlu0 %492
    %v497 = vsel %vm352, %v486, 0
    %v500 = vsel %vm352, %v487, 0
    %502 = vmatprep.subr.mxu0 0.0
    %503 = vmatpush1.msra.mxu0 %v491
    %504 = vmatprep.subr.mxu0 0.0
    %505 = vmatpush1.msra.mxu0 %v493
    %506 = vmatprep.subr.mxu0 0.0
    %507 = vmatpush1.msra.mxu0 0.0
    %508 = vmatprep.subr.mxu0 0.0
    %509 = vmatpush1.msra.mxu0 0.0
    %510 = vmatprep.subr.mxu0 0.0
    %511 = vmatpush1.msra.mxu0 0.0
    %512 = vmatprep.subr.mxu0 0.0
    %513 = vmatpush1.msra.mxu0 0.0
    %514 = vmatprep.subr.mxu0 0.0
    %515 = vmatpush1.msra.mxu0 0.0
    %516 = vmatprep.subr.mxu0 0.0
    %517 = vmatpush1.msra.mxu0 0.0
    %518 = vmatprep.subr.mxu0 0.0
    %519 = vmatpush1.msra.mxu0 0.0
    %520 = vmatprep.subr.mxu0 0.0
    %521 = vmatpush1.msra.mxu0 0.0
    %522 = vmatprep.subr.mxu0 0.0
    %523 = vmatpush1.msra.mxu0 0.0
    %524 = vmatprep.subr.mxu0 0.0
    %525 = vmatpush1.msra.mxu0 0.0
    %526 = vmatprep.subr.mxu0 0.0
    %527 = vmatpush1.msra.mxu0 0.0
    %528 = vmatprep.subr.mxu0 0.0
    %529 = vmatpush1.msra.mxu0 0.0
    %530 = vmatprep.subr.mxu0 0.0
    %531 = vmatpush1.msra.mxu0 0.0
    %532 = vmatprep.subr.mxu0 0.0
    %533 = vmatpush1.msra.mxu0 0.0
    %534 = vmatprep.subr.mxu0 0.0
    %535 = vmatpush1.msra.mxu0 0.0
    %536 = vmatprep.subr.mxu0 0.0
    %537 = vmatpush1.msra.mxu0 0.0
    %538 = vmatprep.subr.mxu0 0.0
    %539 = vmatpush1.msra.mxu0 0.0
    %540 = vmatprep.subr.mxu0 0.0
    %541 = vmatpush1.msra.mxu0 0.0
    %542 = vmatprep.subr.mxu0 0.0
    %543 = vmatpush1.msra.mxu0 0.0
    %544 = vmatprep.subr.mxu0 0.0
    %545 = vmatpush1.msra.mxu0 0.0
    %546 = vmatprep.subr.mxu0 0.0
    %547 = vmatpush1.msra.mxu0 0.0
    %548 = vmatprep.subr.mxu0 0.0
    %549 = vmatpush1.msra.mxu0 0.0
    %550 = vmatprep.subr.mxu0 0.0
    %551 = vmatpush1.msra.mxu0 0.0
    %552 = vmatprep.subr.mxu0 0.0
    %553 = vmatpush1.msra.mxu0 0.0
    %554 = vmatprep.subr.mxu0 0.0
    %555 = vmatpush1.msra.mxu0 0.0
    %556 = vmatprep.subr.mxu0 0.0
    %557 = vmatpush1.msra.mxu0 0.0
    %558 = vmatprep.subr.mxu0 0.0
    %559 = vmatpush1.msra.mxu0 0.0
    %560 = vmatprep.subr.mxu0 0.0
    %561 = vmatpush1.msra.mxu0 0.0
    %562 = vmatprep.subr.mxu0 0.0
    %563 = vmatpush1.msra.mxu0 0.0
    %564 = vmatprep.subr.mxu0 0.0
    %565 = vmatpush1.msra.mxu0 0.0
    %566 = vmatprep.mubr.f32.mxu0 0.0
    %567 = vmatmul.mubr.f32.gmra.mrb[0].mxu0 %v497
    %v568 = vpop.f32.mrb[0].mxu0
    %v569 = vadd.f32 0.0, %v568
    %v570 = vpop.f32.mrb[0].mxu0
    %571 = vmatprep.mubr.f32.mxu0 0.0
    %572 = vmatmul.mubr.f32.gmra.mrb[0].mxu0 %v500
    %v573 = vpop.f32.mrb[0].mxu0
    %v574 = vadd.f32 0.0, %v573
    %v575 = vpop.f32.mrb[0].mxu0
    %576 = vdwg.mxu0
    %v578 = vsel %vm352, %v373, 0
    %v581 = vsel %vm352, %v374, 0
    %583 = vmatprep.subr.mxu0 0.0
    %584 = vmatpush1.msra.mxu0 %v256
    %585 = vmatprep.subr.mxu0 0.0
    %586 = vmatpush1.msra.mxu0 %v261
    %587 = vmatprep.subr.mxu0 0.0
    %588 = vmatpush1.msra.mxu0 0.0
    %589 = vmatprep.subr.mxu0 0.0
    %590 = vmatpush1.msra.mxu0 0.0
    %591 = vmatprep.subr.mxu0 0.0
    %592 = vmatpush1.msra.mxu0 0.0
    %593 = vmatprep.subr.mxu0 0.0
    %594 = vmatpush1.msra.mxu0 0.0
    %595 = vmatprep.subr.mxu0 0.0
    %596 = vmatpush1.msra.mxu0 0.0
    %597 = vmatprep.subr.mxu0 0.0
    %598 = vmatpush1.msra.mxu0 0.0
    %599 = vmatprep.subr.mxu0 0.0
    %600 = vmatpush1.msra.mxu0 0.0
    %601 = vmatprep.subr.mxu0 0.0
    %602 = vmatpush1.msra.mxu0 0.0
    %603 = vmatprep.subr.mxu0 0.0
    %604 = vmatpush1.msra.mxu0 0.0
    %605 = vmatprep.subr.mxu0 0.0
    %606 = vmatpush1.msra.mxu0 0.0
    %607 = vmatprep.subr.mxu0 0.0
    %608 = vmatpush1.msra.mxu0 0.0
    %609 = vmatprep.subr.mxu0 0.0
    %610 = vmatpush1.msra.mxu0 0.0
    %611 = vmatprep.subr.mxu0 0.0
    %612 = vmatpush1.msra.mxu0 0.0
    %613 = vmatprep.subr.mxu0 0.0
    %614 = vmatpush1.msra.mxu0 0.0
    %615 = vmatprep.subr.mxu0 0.0
    %616 = vmatpush1.msra.mxu0 0.0
    %617 = vmatprep.subr.mxu0 0.0
    %618 = vmatpush1.msra.mxu0 0.0
    %619 = vmatprep.subr.mxu0 0.0
    %620 = vmatpush1.msra.mxu0 0.0
    %621 = vmatprep.subr.mxu0 0.0
    %622 = vmatpush1.msra.mxu0 0.0
    %623 = vmatprep.subr.mxu0 0.0
    %624 = vmatpush1.msra.mxu0 0.0
    %625 = vmatprep.subr.mxu0 0.0
    %626 = vmatpush1.msra.mxu0 0.0
    %627 = vmatprep.subr.mxu0 0.0
    %628 = vmatpush1.msra.mxu0 0.0
    %629 = vmatprep.subr.mxu0 0.0
    %630 = vmatpush1.msra.mxu0 0.0
    %631 = vmatprep.subr.mxu0 0.0
    %632 = vmatpush1.msra.mxu0 0.0
    %633 = vmatprep.subr.mxu0 0.0
    %634 = vmatpush1.msra.mxu0 0.0
    %635 = vmatprep.subr.mxu0 0.0
    %636 = vmatpush1.msra.mxu0 0.0
    %637 = vmatprep.subr.mxu0 0.0
    %638 = vmatpush1.msra.mxu0 0.0
    %639 = vmatprep.subr.mxu0 0.0
    %640 = vmatpush1.msra.mxu0 0.0
    %641 = vmatprep.subr.mxu0 0.0
    %642 = vmatpush1.msra.mxu0 0.0
    %643 = vmatprep.subr.mxu0 0.0
    %644 = vmatpush1.msra.mxu0 0.0
    %645 = vmatprep.subr.mxu0 0.0
    %646 = vmatpush1.msra.mxu0 0.0
    %647 = vmatprep.mubr.f32.mxu0 0.0
    %648 = vmatmul.mubr.f32.gmra.mrb[0].mxu0 %v578
    %v649 = vpop.f32.mrb[0].mxu0
    %v650 = vadd.f32 %v569, %v649
    %v651 = vpop.f32.mrb[0].mxu0
    %652 = vmatprep.mubr.f32.mxu0 0.0
    %653 = vmatmul.mubr.f32.gmra.mrb[0].mxu0 %v581
    %v654 = vpop.f32.mrb[0].mxu0
    %v655 = vadd.f32 %v574, %v654
    %v656 = vpop.f32.mrb[0].mxu0
    %657 = vdwg.mxu0
    %658 = vrot.lane.b32.xlu0 %v171, 112
    %v659 = vpop.permute.xlu0 %658
    %660 = vrot.lane.b32.xlu0 %v176, 112
    %v661 = vpop.permute.xlu0 %660
    %662 = vrot.lane.b32.xlu0 %v171, 80
    %v663 = vpop.permute.xlu0 %662
    %664 = vrot.lane.b32.xlu0 %v176, 80
    %v665 = vpop.permute.xlu0 %664
    %v666 = vsel %vm268, %v659, 0
    %v668 = vsel %vm268, %v661, 0
    %v670 = vsel %vm268, %v663, 0
    %v672 = vsel %vm268, %v665, 0
    %674 = vmatprep.subr.mxu0 0.0
    %675 = vmatpush1.xpose.msra.mxu0 %v670
    %676 = vmatprep.subr.mxu0 0.0
    %677 = vmatpush1.xpose.msra.mxu0 %v672
    %678 = vmatprep.subr.mxu0 0.0
    %679 = vmatpush1.xpose.msra.mxu0 0.0
    %680 = vmatprep.subr.mxu0 0.0
    %681 = vmatpush1.xpose.msra.mxu0 0.0
    %682 = vmatprep.subr.mxu0 0.0
    %683 = vmatpush1.xpose.msra.mxu0 0.0
    %684 = vmatprep.subr.mxu0 0.0
    %685 = vmatpush1.xpose.msra.mxu0 0.0
    %686 = vmatprep.subr.mxu0 0.0
    %687 = vmatpush1.xpose.msra.mxu0 0.0
    %688 = vmatprep.subr.mxu0 0.0
    %689 = vmatpush1.xpose.msra.mxu0 0.0
    %690 = vmatprep.subr.mxu0 0.0
    %691 = vmatpush1.xpose.msra.mxu0 0.0
    %692 = vmatprep.subr.mxu0 0.0
    %693 = vmatpush1.xpose.msra.mxu0 0.0
    %694 = vmatprep.subr.mxu0 0.0
    %695 = vmatpush1.xpose.msra.mxu0 0.0
    %696 = vmatprep.subr.mxu0 0.0
    %697 = vmatpush1.xpose.msra.mxu0 0.0
    %698 = vmatprep.subr.mxu0 0.0
    %699 = vmatpush1.xpose.msra.mxu0 0.0
    %700 = vmatprep.subr.mxu0 0.0
    %701 = vmatpush1.xpose.msra.mxu0 0.0
    %702 = vmatprep.subr.mxu0 0.0
    %703 = vmatpush1.xpose.msra.mxu0 0.0
    %704 = vmatprep.subr.mxu0 0.0
    %705 = vmatpush1.xpose.msra.mxu0 0.0
    %706 = vmatprep.subr.mxu0 0.0
    %707 = vmatpush1.xpose.msra.mxu0 0.0
    %708 = vmatprep.subr.mxu0 0.0
    %709 = vmatpush1.xpose.msra.mxu0 0.0
    %710 = vmatprep.subr.mxu0 0.0
    %711 = vmatpush1.xpose.msra.mxu0 0.0
    %712 = vmatprep.subr.mxu0 0.0
    %713 = vmatpush1.xpose.msra.mxu0 0.0
    %714 = vmatprep.subr.mxu0 0.0
    %715 = vmatpush1.xpose.msra.mxu0 0.0
    %716 = vmatprep.subr.mxu0 0.0
    %717 = vmatpush1.xpose.msra.mxu0 0.0
    %718 = vmatprep.subr.mxu0 0.0
    %719 = vmatpush1.xpose.msra.mxu0 0.0
    %720 = vmatprep.subr.mxu0 0.0
    %721 = vmatpush1.xpose.msra.mxu0 0.0
    %722 = vmatprep.subr.mxu0 0.0
    %723 = vmatpush1.xpose.msra.mxu0 0.0
    %724 = vmatprep.subr.mxu0 0.0
    %725 = vmatpush1.xpose.msra.mxu0 0.0
    %726 = vmatprep.subr.mxu0 0.0
    %727 = vmatpush1.xpose.msra.mxu0 0.0
    %728 = vmatprep.subr.mxu0 0.0
    %729 = vmatpush1.xpose.msra.mxu0 0.0
    %730 = vmatprep.subr.mxu0 0.0
    %731 = vmatpush1.xpose.msra.mxu0 0.0
    %732 = vmatprep.subr.mxu0 0.0
    %733 = vmatpush1.xpose.msra.mxu0 0.0
    %734 = vmatprep.subr.mxu0 0.0
    %735 = vmatpush1.xpose.msra.mxu0 0.0
    %736 = vmatprep.subr.mxu0 0.0
    %737 = vmatpush1.xpose.msra.mxu0 0.0
    %738 = vmatprep.mubr.f32.mxu0 0.0
    %739 = vmatmul.mubr.f32.gmra.mrb[0].mxu0 %v666
    %v740 = vpop.f32.mrb[0].mxu0
    %v741 = vadd.f32 %v52, %v740
    %v742 = vpop.f32.mrb[0].mxu0
    %743 = vmatprep.mubr.f32.mxu0 0.0
    %744 = vmatmul.mubr.f32.gmra.mrb[0].mxu0 %v668
    %v745 = vpop.f32.mrb[0].mxu0
    %v746 = vadd.f32 %v53, %v745
    %v747 = vpop.f32.mrb[0].mxu0
    %748 = vdwg.mxu0
    %v749 = vsel %vm352, %v741, -inf
    %750 = vmax.xlane.f32.xlu0 %v749
    %v751 = vpop.xlane.xlu0 %750
    %v752 = vsel %vm352, %v746, -inf
    %753 = vmax.xlane.f32.xlu0 %v752
    %v754 = vpop.xlane.xlu0 %753
    %v755 = vsub.f32 %v741, %v751
    %v756 = vsub.f32 %v746, %v754
    %v757 = vmul.f32 %v755, 1.442695
    %v758 = vpow.pop %v757
    %v759 = vmul.f32 %v756, 1.442695
    %v760 = vpow.pop %v759
    %v761 = vsel %vm352, %v758, 0.0
    %762 = vadd.xlane.f32.xlu0 %v761
    %v763 = vpop.xlane.xlu0 %762
    %v764 = vsel %vm352, %v760, 0.0
    %765 = vadd.xlane.f32.xlu0 %v764
    %v766 = vpop.xlane.xlu0 %765
    %v767 = vrcp.pop %v763
    %v768 = vrcp.pop %v766
    %v769 = vmul.f32 %v758, %v767
    %v770 = vmul.f32 %v760, %v768
    %771 = vrot.lane.b32.xlu0 %v256, 64
    %v772 = vpop.permute.xlu0 %771
    %773 = vrot.lane.b32.xlu0 %v261, 64
    %v774 = vpop.permute.xlu0 %773
    %v778 = vsel %vm352, %v769, 0
    %v781 = vsel %vm352, %v770, 0
    %783 = vmatprep.subr.mxu0 0.0
    %784 = vmatpush1.msra.mxu0 %v772
    %785 = vmatprep.subr.mxu0 0.0
    %786 = vmatpush1.msra.mxu0 %v774
    %787 = vmatprep.subr.mxu0 0.0
    %788 = vmatpush1.msra.mxu0 0.0
    %789 = vmatprep.subr.mxu0 0.0
    %790 = vmatpush1.msra.mxu0 0.0
    %791 = vmatprep.subr.mxu0 0.0
    %792 = vmatpush1.msra.mxu0 0.0
    %793 = vmatprep.subr.mxu0 0.0
    %794 = vmatpush1.msra.mxu0 0.0
    %795 = vmatprep.subr.mxu0 0.0
    %796 = vmatpush1.msra.mxu0 0.0
    %797 = vmatprep.subr.mxu0 0.0
    %798 = vmatpush1.msra.mxu0 0.0
    %799 = vmatprep.subr.mxu0 0.0
    %800 = vmatpush1.msra.mxu0 0.0
    %801 = vmatprep.subr.mxu0 0.0
    %802 = vmatpush1.msra.mxu0 0.0
    %803 = vmatprep.subr.mxu0 0.0
    %804 = vmatpush1.msra.mxu0 0.0
    %805 = vmatprep.subr.mxu0 0.0
    %806 = vmatpush1.msra.mxu0 0.0
    %807 = vmatprep.subr.mxu0 0.0
    %808 = vmatpush1.msra.mxu0 0.0
    %809 = vmatprep.subr.mxu0 0.0
    %810 = vmatpush1.msra.mxu0 0.0
    %811 = vmatprep.subr.mxu0 0.0
    %812 = vmatpush1.msra.mxu0 0.0
    %813 = vmatprep.subr.mxu0 0.0
    %814 = vmatpush1.msra.mxu0 0.0
    %815 = vmatprep.subr.mxu0 0.0
    %816 = vmatpush1.msra.mxu0 0.0
    %817 = vmatprep.subr.mxu0 0.0
    %818 = vmatpush1.msra.mxu0 0.0
    %819 = vmatprep.subr.mxu0 0.0
    %820 = vmatpush1.msra.mxu0 0.0
    %821 = vmatprep.subr.mxu0 0.0
    %822 = vmatpush1.msra.mxu0 0.0
    %823 = vmatprep.subr.mxu0 0.0
    %824 = vmatpush1.msra.mxu0 0.0
    %825 = vmatprep.subr.mxu0 0.0
    %826 = vmatpush1.msra.mxu0 0.0
    %827 = vmatprep.subr.mxu0 0.0
    %828 = vmatpush1.msra.mxu0 0.0
    %829 = vmatprep.subr.mxu0 0.0
    %830 = vmatpush1.msra.mxu0 0.0
    %831 = vmatprep.subr.mxu0 0.0
    %832 = vmatpush1.msra.mxu0 0.0
    %833 = vmatprep.subr.mxu0 0.0
    %834 = vmatpush1.msra.mxu0 0.0
    %835 = vmatprep.subr.mxu0 0.0
    %836 = vmatpush1.msra.mxu0 0.0
    %837 = vmatprep.subr.mxu0 0.0
    %838 = vmatpush1.msra.mxu0 0.0
    %839 = vmatprep.subr.mxu0 0.0
    %840 = vmatpush1.msra.mxu0 0.0
    %841 = vmatprep.subr.mxu0 0.0
    %842 = vmatpush1.msra.mxu0 0.0
    %843 = vmatprep.subr.mxu0 0.0
    %844 = vmatpush1.msra.mxu0 0.0
    %845 = vmatprep.subr.mxu0 0.0
    %846 = vmatpush1.msra.mxu0 0.0
    %847 = vmatprep.mubr.f32.mxu0 0.0
    %848 = vmatmul.mubr.f32.gmra.mrb[0].mxu0 %v778
    %v849 = vpop.f32.mrb[0].mxu0
    %v850 = vadd.f32 0.0, %v849
    %v851 = vpop.f32.mrb[0].mxu0
    %852 = vmatprep.mubr.f32.mxu0 0.0
    %853 = vmatmul.mubr.f32.gmra.mrb[0].mxu0 %v781
    %v854 = vpop.f32.mrb[0].mxu0
    %v855 = vadd.f32 0.0, %v854
    %v856 = vpop.f32.mrb[0].mxu0
    %857 = vdwg.mxu0
    %v858 = vadd.f32 %v650, %v850
    %v859 = vadd.f32 %v655, %v855
    %860 = vrot.lane.b32.xlu0 %v171, 104
    %v861 = vpop.permute.xlu0 %860
    %862 = vrot.lane.b32.xlu0 %v176, 104
    %v863 = vpop.permute.xlu0 %862
    %864 = vrot.lane.b32.xlu0 %v171, 72
    %v865 = vpop.permute.xlu0 %864
    %866 = vrot.lane.b32.xlu0 %v176, 72
    %v867 = vpop.permute.xlu0 %866
    %v868 = vsel %vm268, %v861, 0
    %v870 = vsel %vm268, %v863, 0
    %v872 = vsel %vm268, %v865, 0
    %v874 = vsel %vm268, %v867, 0
    %876 = vmatprep.subr.mxu0 0.0
    %877 = vmatpush1.xpose.msra.mxu0 %v872
    %878 = vmatprep.subr.mxu0 0.0
    %879 = vmatpush1.xpose.msra.mxu0 %v874
    %880 = vmatprep.subr.mxu0 0.0
    %881 = vmatpush1.xpose.msra.mxu0 0.0
    %882 = vmatprep.subr.mxu0 0.0
    %883 = vmatpush1.xpose.msra.mxu0 0.0
    %884 = vmatprep.subr.mxu0 0.0
    %885 = vmatpush1.xpose.msra.mxu0 0.0
    %886 = vmatprep.subr.mxu0 0.0
    %887 = vmatpush1.xpose.msra.mxu0 0.0
    %888 = vmatprep.subr.mxu0 0.0
    %889 = vmatpush1.xpose.msra.mxu0 0.0
    %890 = vmatprep.subr.mxu0 0.0
    %891 = vmatpush1.xpose.msra.mxu0 0.0
    %892 = vmatprep.subr.mxu0 0.0
    %893 = vmatpush1.xpose.msra.mxu0 0.0
    %894 = vmatprep.subr.mxu0 0.0
    %895 = vmatpush1.xpose.msra.mxu0 0.0
    %896 = vmatprep.subr.mxu0 0.0
    %897 = vmatpush1.xpose.msra.mxu0 0.0
    %898 = vmatprep.subr.mxu0 0.0
    %899 = vmatpush1.xpose.msra.mxu0 0.0
    %900 = vmatprep.subr.mxu0 0.0
    %901 = vmatpush1.xpose.msra.mxu0 0.0
    %902 = vmatprep.subr.mxu0 0.0
    %903 = vmatpush1.xpose.msra.mxu0 0.0
    %904 = vmatprep.subr.mxu0 0.0
    %905 = vmatpush1.xpose.msra.mxu0 0.0
    %906 = vmatprep.subr.mxu0 0.0
    %907 = vmatpush1.xpose.msra.mxu0 0.0
    %908 = vmatprep.subr.mxu0 0.0
    %909 = vmatpush1.xpose.msra.mxu0 0.0
    %910 = vmatprep.subr.mxu0 0.0
    %911 = vmatpush1.xpose.msra.mxu0 0.0
    %912 = vmatprep.subr.mxu0 0.0
    %913 = vmatpush1.xpose.msra.mxu0 0.0
    %914 = vmatprep.subr.mxu0 0.0
    %915 = vmatpush1.xpose.msra.mxu0 0.0
    %916 = vmatprep.subr.mxu0 0.0
    %917 = vmatpush1.xpose.msra.mxu0 0.0
    %918 = vmatprep.subr.mxu0 0.0
    %919 = vmatpush1.xpose.msra.mxu0 0.0
    %920 = vmatprep.subr.mxu0 0.0
    %921 = vmatpush1.xpose.msra.mxu0 0.0
    %922 = vmatprep.subr.mxu0 0.0
    %923 = vmatpush1.xpose.msra.mxu0 0.0
    %924 = vmatprep.subr.mxu0 0.0
    %925 = vmatpush1.xpose.msra.mxu0 0.0
    %926 = vmatprep.subr.mxu0 0.0
    %927 = vmatpush1.xpose.msra.mxu0 0.0
    %928 = vmatprep.subr.mxu0 0.0
    %929 = vmatpush1.xpose.msra.mxu0 0.0
    %930 = vmatprep.subr.mxu0 0.0
    %931 = vmatpush1.xpose.msra.mxu0 0.0
    %932 = vmatprep.subr.mxu0 0.0
    %933 = vmatpush1.xpose.msra.mxu0 0.0
    %934 = vmatprep.subr.mxu0 0.0
    %935 = vmatpush1.xpose.msra.mxu0 0.0
    %936 = vmatprep.subr.mxu0 0.0
    %937 = vmatpush1.xpose.msra.mxu0 0.0
    %938 = vmatprep.subr.mxu0 0.0
    %939 = vmatpush1.xpose.msra.mxu0 0.0
    %940 = vmatprep.mubr.f32.mxu0 0.0
    %941 = vmatmul.mubr.f32.gmra.mrb[0].mxu0 %v868
    %v942 = vpop.f32.mrb[0].mxu0
    %v943 = vadd.f32 %v52, %v942
    %v944 = vpop.f32.mrb[0].mxu0
    %945 = vmatprep.mubr.f32.mxu0 0.0
    %946 = vmatmul.mubr.f32.gmra.mrb[0].mxu0 %v870
    %v947 = vpop.f32.mrb[0].mxu0
    %v948 = vadd.f32 %v53, %v947
    %v949 = vpop.f32.mrb[0].mxu0
    %950 = vdwg.mxu0
    %v951 = vsel %vm352, %v943, -inf
    %952 = vmax.xlane.f32.xlu0 %v951
    %v953 = vpop.xlane.xlu0 %952
    %v954 = vsel %vm352, %v948, -inf
    %955 = vmax.xlane.f32.xlu0 %v954
    %v956 = vpop.xlane.xlu0 %955
    %v957 = vsub.f32 %v943, %v953
    %v958 = vsub.f32 %v948, %v956
    %v959 = vmul.f32 %v957, 1.442695
    %v960 = vpow.pop %v959
    %v961 = vmul.f32 %v958, 1.442695
    %v962 = vpow.pop %v961
    %v963 = vsel %vm352, %v960, 0.0
    %964 = vadd.xlane.f32.xlu0 %v963
    %v965 = vpop.xlane.xlu0 %964
    %v966 = vsel %vm352, %v962, 0.0
    %967 = vadd.xlane.f32.xlu0 %v966
    %v968 = vpop.xlane.xlu0 %967
    %v969 = vrcp.pop %v965
    %v970 = vrcp.pop %v968
    %v971 = vmul.f32 %v960, %v969
    %v972 = vmul.f32 %v962, %v970
    %973 = vrot.lane.b32.xlu0 %v256, 32
    %v974 = vpop.permute.xlu0 %973
    %975 = vrot.lane.b32.xlu0 %v261, 32
    %v976 = vpop.permute.xlu0 %975
    %v980 = vsel %vm352, %v971, 0
    %v983 = vsel %vm352, %v972, 0
    %985 = vmatprep.subr.mxu0 0.0
    %986 = vmatpush1.msra.mxu0 %v974
    %987 = vmatprep.subr.mxu0 0.0
    %988 = vmatpush1.msra.mxu0 %v976
    %989 = vmatprep.subr.mxu0 0.0
    %990 = vmatpush1.msra.mxu0 0.0
    %991 = vmatprep.subr.mxu0 0.0
    %992 = vmatpush1.msra.mxu0 0.0
    %993 = vmatprep.subr.mxu0 0.0
    %994 = vmatpush1.msra.mxu0 0.0
    %995 = vmatprep.subr.mxu0 0.0
    %996 = vmatpush1.msra.mxu0 0.0
    %997 = vmatprep.subr.mxu0 0.0
    %998 = vmatpush1.msra.mxu0 0.0
    %999 = vmatprep.subr.mxu0 0.0
    %1000 = vmatpush1.msra.mxu0 0.0
    %1001 = vmatprep.subr.mxu0 0.0
    %1002 = vmatpush1.msra.mxu0 0.0
    %1003 = vmatprep.subr.mxu0 0.0
    %1004 = vmatpush1.msra.mxu0 0.0
    %1005 = vmatprep.subr.mxu0 0.0
    %1006 = vmatpush1.msra.mxu0 0.0
    %1007 = vmatprep.subr.mxu0 0.0
    %1008 = vmatpush1.msra.mxu0 0.0
    %1009 = vmatprep.subr.mxu0 0.0
    %1010 = vmatpush1.msra.mxu0 0.0
    %1011 = vmatprep.subr.mxu0 0.0
    %1012 = vmatpush1.msra.mxu0 0.0
    %1013 = vmatprep.subr.mxu0 0.0
    %1014 = vmatpush1.msra.mxu0 0.0
    %1015 = vmatprep.subr.mxu0 0.0
    %1016 = vmatpush1.msra.mxu0 0.0
    %1017 = vmatprep.subr.mxu0 0.0
    %1018 = vmatpush1.msra.mxu0 0.0
    %1019 = vmatprep.subr.mxu0 0.0
    %1020 = vmatpush1.msra.mxu0 0.0
    %1021 = vmatprep.subr.mxu0 0.0
    %1022 = vmatpush1.msra.mxu0 0.0
    %1023 = vmatprep.subr.mxu0 0.0
    %1024 = vmatpush1.msra.mxu0 0.0
    %1025 = vmatprep.subr.mxu0 0.0
    %1026 = vmatpush1.msra.mxu0 0.0
    %1027 = vmatprep.subr.mxu0 0.0
    %1028 = vmatpush1.msra.mxu0 0.0
    %1029 = vmatprep.subr.mxu0 0.0
    %1030 = vmatpush1.msra.mxu0 0.0
    %1031 = vmatprep.subr.mxu0 0.0
    %1032 = vmatpush1.msra.mxu0 0.0
    %1033 = vmatprep.subr.mxu0 0.0
    %1034 = vmatpush1.msra.mxu0 0.0
    %1035 = vmatprep.subr.mxu0 0.0
    %1036 = vmatpush1.msra.mxu0 0.0
    %1037 = vmatprep.subr.mxu0 0.0
    %1038 = vmatpush1.msra.mxu0 0.0
    %1039 = vmatprep.subr.mxu0 0.0
    %1040 = vmatpush1.msra.mxu0 0.0
    %1041 = vmatprep.subr.mxu0 0.0
    %1042 = vmatpush1.msra.mxu0 0.0
    %1043 = vmatprep.subr.mxu0 0.0
    %1044 = vmatpush1.msra.mxu0 0.0
    %1045 = vmatprep.subr.mxu0 0.0
    %1046 = vmatpush1.msra.mxu0 0.0
    %1047 = vmatprep.subr.mxu0 0.0
    %1048 = vmatpush1.msra.mxu0 0.0
    %1049 = vmatprep.mubr.f32.mxu0 0.0
    %1050 = vmatmul.mubr.f32.gmra.mrb[0].mxu0 %v980
    %v1051 = vpop.f32.mrb[0].mxu0
    %v1052 = vadd.f32 0.0, %v1051
    %v1053 = vpop.f32.mrb[0].mxu0
    %1054 = vmatprep.mubr.f32.mxu0 0.0
    %1055 = vmatmul.mubr.f32.gmra.mrb[0].mxu0 %v983
    %v1056 = vpop.f32.mrb[0].mxu0
    %v1057 = vadd.f32 0.0, %v1056
    %v1058 = vpop.f32.mrb[0].mxu0
    %1059 = vdwg.mxu0
    %v1060 = vadd.f32 %v858, %v1052
    %v1061 = vadd.f32 %v859, %v1057
    %v1062 = vadd.f32 %v29, %v1060
    %v1063 = vadd.f32 %v30, %v1061
    %v1064 = vlaneseq
    %v1065 = vshrl.u32 %v1064, 7
    %v1066 = vsub.s32 3, %v1065
    %v1067 = vrot.slane %v51, %v1066
    %v1068 = vadd.f32 %v1062, %v1067
    %v1069 = vadd.f32 %v1063, %v1067
    %v1070 = vsel %vm54, %v1068, 0.0
    %1071 = vadd.xlane.f32.xlu0 %v1070
    %v1072 = vpop.xlane.xlu0 %1071
    %v1073 = vsel %vm54, %v1069, 0.0
    %1074 = vadd.xlane.f32.xlu0 %v1073
    %v1075 = vpop.xlane.xlu0 %1074
    %v1076 = vmul.f32 %v1072, %v61
    %v1077 = vmul.f32 %v1075, %v61
    %v1078 = vsub.f32 %v1068, %v1076
    %v1079 = vsub.f32 %v1069, %v1077
    %v1080 = vmul.f32 %v1078, %v1078
    %v1081 = vmul.f32 %v1079, %v1079
    %v1082 = vsel %vm54, %v1080, 0.0
    %1083 = vadd.xlane.f32.xlu0 %v1082
    %v1084 = vpop.xlane.xlu0 %1083
    %v1085 = vsel %vm54, %v1081, 0.0
    %1086 = vadd.xlane.f32.xlu0 %v1085
    %v1087 = vpop.xlane.xlu0 %1086
    %v1088 = vmul.f32 %v1084, %v61
    %v1089 = vmul.f32 %v1087, %v61
    %v1090 = vadd.f32 %v1088, 32.0
    %v1091 = vadd.f32 %v1089, 32.0
    %v1092 = vrsqrt.pop %v1090
    %v1093 = vrsqrt.pop %v1091
    %v1094 = vmul.f32 %v1078, %v1092
    %v1095 = vmul.f32 %v1079, %v1093
    %v1096 = vmul.f32 %v1094, %v85
    %v1097 = vmul.f32 %v1095, %v85
    %v1098 = vadd.f32 %v1096, %v91
    %v1099 = vadd.f32 %v1097, %v91
    %v1100 = vlaneseq
    %v1101 = vshrl.u32 %v1100, 7
    %v1102 = vsub.s32 4, %v1101
    %v1103 = vrot.slane %v51, %v1102
    %v1105 = vsel %vm54, %v1098, 0
    %v1108 = vsel %vm54, %v1099, 0
    %1110 = vmatprep.subr.mxu0 0.0
    %1111 = vmatpush1.msra.mxu0 %v39
    %1112 = vmatprep.subr.mxu0 0.0
    %1113 = vmatpush1.msra.mxu0 %v40
    %1114 = vmatprep.subr.mxu0 0.0
    %1115 = vmatpush1.msra.mxu0 %v41
    %1116 = vmatprep.subr.mxu0 0.0
    %1117 = vmatpush1.msra.mxu0 %v42
    %1118 = vmatprep.subr.mxu0 0.0
    %1119 = vmatpush1.msra.mxu0 0.0
    %1120 = vmatprep.subr.mxu0 0.0
    %1121 = vmatpush1.msra.mxu0 0.0
    %1122 = vmatprep.subr.mxu0 0.0
    %1123 = vmatpush1.msra.mxu0 0.0
    %1124 = vmatprep.subr.mxu0 0.0
    %1125 = vmatpush1.msra.mxu0 0.0
    %1126 = vmatprep.subr.mxu0 0.0
    %1127 = vmatpush1.msra.mxu0 0.0
    %1128 = vmatprep.subr.mxu0 0.0
    %1129 = vmatpush1.msra.mxu0 0.0
    %1130 = vmatprep.subr.mxu0 0.0
    %1131 = vmatpush1.msra.mxu0 0.0
    %1132 = vmatprep.subr.mxu0 0.0
    %1133 = vmatpush1.msra.mxu0 0.0
    %1134 = vmatprep.subr.mxu0 0.0
    %1135 = vmatpush1.msra.mxu0 0.0
    %1136 = vmatprep.subr.mxu0 0.0
    %1137 = vmatpush1.msra.mxu0 0.0
    %1138 = vmatprep.subr.mxu0 0.0
    %1139 = vmatpush1.msra.mxu0 0.0
    %1140 = vmatprep.subr.mxu0 0.0
    %1141 = vmatpush1.msra.mxu0 0.0
    %1142 = vmatprep.subr.mxu0 0.0
    %1143 = vmatpush1.msra.mxu0 0.0
    %1144 = vmatprep.subr.mxu0 0.0
    %1145 = vmatpush1.msra.mxu0 0.0
    %1146 = vmatprep.subr.mxu0 0.0
    %1147 = vmatpush1.msra.mxu0 0.0
    %1148 = vmatprep.subr.mxu0 0.0
    %1149 = vmatpush1.msra.mxu0 0.0
    %1150 = vmatprep.subr.mxu0 0.0
    %1151 = vmatpush1.msra.mxu0 0.0
    %1152 = vmatprep.subr.mxu0 0.0
    %1153 = vmatpush1.msra.mxu0 0.0
    %1154 = vmatprep.subr.mxu0 0.0
    %1155 = vmatpush1.msra.mxu0 0.0
    %1156 = vmatprep.subr.mxu0 0.0
    %1157 = vmatpush1.msra.mxu0 0.0
    %1158 = vmatprep.subr.mxu0 0.0
    %1159 = vmatpush1.msra.mxu0 0.0
    %1160 = vmatprep.subr.mxu0 0.0
    %1161 = vmatpush1.msra.mxu0 0.0
    %1162 = vmatprep.subr.mxu0 0.0
    %1163 = vmatpush1.msra.mxu0 0.0
    %1164 = vmatprep.subr.mxu0 0.0
    %1165 = vmatpush1.msra.mxu0 0.0
    %1166 = vmatprep.subr.mxu0 0.0
    %1167 = vmatpush1.msra.mxu0 0.0
    %1168 = vmatprep.subr.mxu0 0.0
    %1169 = vmatpush1.msra.mxu0 0.0
    %1170 = vmatprep.subr.mxu0 0.0
    %1171 = vmatpush1.msra.mxu0 0.0
    %1172 = vmatprep.subr.mxu0 0.0
    %1173 = vmatpush1.msra.mxu0 0.0
    %1174 = vmatprep.mubr.f32.mxu0 0.0
    %1175 = vmatmul.mubr.f32.gmra.mrb[0].mxu0 %v1105
    %v1176 = vpop.f32.mrb[0].mxu0
    %v1177 = vadd.f32 %v1103, %v1176
    %v1178 = vpop.f32.mrb[0].mxu0
    %1179 = vmatprep.mubr.f32.mxu0 0.0
    %1180 = vmatmul.mubr.f32.gmra.mrb[0].mxu0 %v1108
    %v1181 = vpop.f32.mrb[0].mxu0
    %v1182 = vadd.f32 %v1103, %v1181
    %v1183 = vpop.f32.mrb[0].mxu0
    %1184 = vdwg.mxu0
    %v1185 = vmax.f32 %v1177, 0.0
    %v1186 = vmax.f32 %v1182, 0.0
    %v1187 = vlaneseq
    %v1188 = vshrl.u32 %v1187, 7
    %v1189 = vsub.s32 5, %v1188
    %v1190 = vrot.slane %v51, %v1189
    %vm1191 = vcmask 523264
    %v1193 = vsel %vm1191, %v1185, 0
    %v1196 = vsel %vm1191, %v1186, 0
    %1198 = vmatprep.subr.mxu0 0.0
    %1199 = vmatpush1.msra.mxu0 %v43
    %1200 = vmatprep.subr.mxu0 0.0
    %1201 = vmatpush1.msra.mxu0 %v44
    %1202 = vmatprep.subr.mxu0 0.0
    %1203 = vmatpush1.msra.mxu0 %v45
    %1204 = vmatprep.subr.mxu0 0.0
    %1205 = vmatpush1.msra.mxu0 %v46
    %1206 = vmatprep.subr.mxu0 0.0
    %1207 = vmatpush1.msra.mxu0 %v47
    %1208 = vmatprep.subr.mxu0 0.0
    %1209 = vmatpush1.msra.mxu0 %v48
    %1210 = vmatprep.subr.mxu0 0.0
    %1211 = vmatpush1.msra.mxu0 %v49
    %1212 = vmatprep.subr.mxu0 0.0
    %1213 = vmatpush1.msra.mxu0 %v50
    %1214 = vmatprep.subr.mxu0 0.0
    %1215 = vmatpush1.msra.mxu0 0.0
    %1216 = vmatprep.subr.mxu0 0.0
    %1217 = vmatpush1.msra.mxu0 0.0
    %1218 = vmatprep.subr.mxu0 0.0
    %1219 = vmatpush1.msra.mxu0 0.0
    %1220 = vmatprep.subr.mxu0 0.0
    %1221 = vmatpush1.msra.mxu0 0.0
    %1222 = vmatprep.subr.mxu0 0.0
    %1223 = vmatpush1.msra.mxu0 0.0
    %1224 = vmatprep.subr.mxu0 0.0
    %1225 = vmatpush1.msra.mxu0 0.0
    %1226 = vmatprep.subr.mxu0 0.0
    %1227 = vmatpush1.msra.mxu0 0.0
    %1228 = vmatprep.subr.mxu0 0.0
    %1229 = vmatpush1.msra.mxu0 0.0
    %1230 = vmatprep.subr.mxu0 0.0
    %1231 = vmatpush1.msra.mxu0 0.0
    %1232 = vmatprep.subr.mxu0 0.0
    %1233 = vmatpush1.msra.mxu0 0.0
    %1234 = vmatprep.subr.mxu0 0.0
    %1235 = vmatpush1.msra.mxu0 0.0
    %1236 = vmatprep.subr.mxu0 0.0
    %1237 = vmatpush1.msra.mxu0 0.0
    %1238 = vmatprep.subr.mxu0 0.0
    %1239 = vmatpush1.msra.mxu0 0.0
    %1240 = vmatprep.subr.mxu0 0.0
    %1241 = vmatpush1.msra.mxu0 0.0
    %1242 = vmatprep.subr.mxu0 0.0
    %1243 = vmatpush1.msra.mxu0 0.0
    %1244 = vmatprep.subr.mxu0 0.0
    %1245 = vmatpush1.msra.mxu0 0.0
    %1246 = vmatprep.subr.mxu0 0.0
    %1247 = vmatpush1.msra.mxu0 0.0
    %1248 = vmatprep.subr.mxu0 0.0
    %1249 = vmatpush1.msra.mxu0 0.0
    %1250 = vmatprep.subr.mxu0 0.0
    %1251 = vmatpush1.msra.mxu0 0.0
    %1252 = vmatprep.subr.mxu0 0.0
    %1253 = vmatpush1.msra.mxu0 0.0
    %1254 = vmatprep.subr.mxu0 0.0
    %1255 = vmatpush1.msra.mxu0 0.0
    %1256 = vmatprep.subr.mxu0 0.0
    %1257 = vmatpush1.msra.mxu0 0.0
    %1258 = vmatprep.subr.mxu0 0.0
    %1259 = vmatpush1.msra.mxu0 0.0
    %1260 = vmatprep.subr.mxu0 0.0
    %1261 = vmatpush1.msra.mxu0 0.0
    %1262 = vmatprep.mubr.f32.mxu0 0.0
    %1263 = vmatmul.mubr.f32.gmra.mrb[0].mxu0 %v1193
    %v1264 = vpop.f32.mrb[0].mxu0
    %v1265 = vadd.f32 %v1190, %v1264
    %v1266 = vpop.f32.mrb[0].mxu0
    %1267 = vmatprep.mubr.f32.mxu0 0.0
    %1268 = vmatmul.mubr.f32.gmra.mrb[0].mxu0 %v1196
    %v1269 = vpop.f32.mrb[0].mxu0
    %v1270 = vadd.f32 %v1190, %v1269
    %v1271 = vpop.f32.mrb[0].mxu0
    %1272 = vdwg.mxu0
    %v1273 = vadd.f32 %v1068, %v1265
    %v1274 = vadd.f32 %v1069, %v1270
    %1275 = vst.msk [vmem:[#allocation5] sm:$0xff] %vm54, %v1273
    %1276 = vst.msk [vmem:[#allocation5 + $0x8] sm:$0xff] %vm54, %v1274
    // Predicated region
    $region18: #{encoder_layer.1} parent=1 // pred_check
      _
    $region19: #{encoder_layer.1} parent=1 // pred_check_branch
      %1278 = sbr.rel (0) target = $region21
    $region20: #{encoder_layer.1} parent=1 // pred_region
      %s1280 = ssub.s32 256, 256
      %1281 = vsyncadd [#allocation4], %s1280
      %s1282 = sshll.u32 [#allocation5], 4
      %s1283 = int_to_ptr.vmem [resolvable:$true] %s1282
      %1288 = dma.vmem_to_hbm [thread:$0]  %s1283, 256, %s3, [#allocation4], 128, 128, 8
    $region21: #{encoder_layer.1} parent=1 // pred_fallthru
      _
    // Predicated region
    $region22: #{encoder_layer.1} parent=1 // pred_check
      _
    $region23: #{encoder_layer.1} parent=1 // pred_check_branch
      %1290 = sbr.rel (0) target = $region25
    $region24: #{encoder_layer.1} parent=1 // pred_region
      %1291 = dma.done [#allocation4], 256
    $region25: #{encoder_layer.1} parent=1 // pred_fallthru
      _
    %1292 = vsyncpa [#allocation3], 1
    %1293 = vsyncpa [#allocation4], 1

</llo_original>
